<compile_context>
chip_gen: v7x
topology: tpu7x:2x2x1
jax: 0.10.0
libtpu: 0.0.40
codegen_flags: <defaults>
</compile_context>

<pallas_src>
import functools
import math

import jax
import jax.numpy as jnp
from jax import lax
from jax.experimental import pallas as pl
from jax.experimental.pallas import tpu as pltpu


def _flash_attn_kernel(q_ref, k_ref, v_ref, o_ref, acc_ref, m_ref, l_ref,
                       *, scale, num_heads, head_dim):
    # q_ref: (1, Lt, H*D), k_ref/v_ref: (1, St, H*D), o_ref: (1, Lt, H*D)
    # acc_ref: (H, Lt, D) f32, m_ref/l_ref: (H, Lt, 1) f32
    si = pl.program_id(2)

    @pl.when(si == 0)
    def _init():
        m_ref[...] = jnp.full_like(m_ref, -jnp.inf)
        l_ref[...] = jnp.zeros_like(l_ref)
        acc_ref[...] = jnp.zeros_like(acc_ref)

    # One lane-dense load per operand; scale folded into q (Lt*H*D multiplies,
    # not Lt*St per head). Per-head lane slices stay in registers.
    q = q_ref[0] * scale          # (Lt, H*D), native dtype
    k = k_ref[0]                  # (St, H*D)
    v = v_ref[0]                  # (St, H*D)

    for h in range(num_heads):    # static unroll over heads
        lo = h * head_dim
        hi = lo + head_dim
        qh = q[:, lo:hi]          # (Lt, D)
        kh = k[:, lo:hi]          # (St, D)
        vh = v[:, lo:hi]          # (St, D)

        # scores[l, s] = sum_d q[l, d] * k[s, d]   (native-dtype MXU, f32 acc)
        s = lax.dot_general(qh, kh, (((1,), (1,)), ((), ())),
                            preferred_element_type=jnp.float32)      # (Lt, St)

        m_prev = m_ref[h]                                            # (Lt, 1)
        m_new = jnp.maximum(m_prev, jnp.max(s, axis=-1, keepdims=True))
        alpha = jnp.exp(m_prev - m_new)                              # (Lt, 1)
        p = jnp.exp(s - m_new)                                       # (Lt, St)

        l_ref[h] = alpha * l_ref[h] + jnp.sum(p, axis=-1, keepdims=True)
        acc_ref[h] = alpha * acc_ref[h] + jnp.dot(
            p.astype(v.dtype), vh, preferred_element_type=jnp.float32)
        m_ref[h] = m_new

    @pl.when(si == pl.num_programs(2) - 1)
    def _finalize():
        outs = []
        for h in range(num_heads):
            denom = l_ref[h]                                   # (Lt, 1), >= 1
            inv = pl.reciprocal(denom, approx=True)             # EUP slot
            inv = inv * (2.0 - denom * inv)                     # Newton -> ~f32
            outs.append(acc_ref[h] * inv)                       # (Lt, D)
        # single lane-dense (Lt, H*D) store
        o_ref[0] = jnp.concatenate(outs, axis=-1).astype(o_ref.dtype)


def _pick_tile(dim, preferred):
    """Largest tile <= preferred that divides dim and is a multiple of 8,
    otherwise the full dim (full-extent blocks are always legal)."""
    if dim <= preferred:
        return dim
    t = preferred - (preferred % 8)
    while t >= 8:
        if dim % t == 0:
            return t
        t -= 8
    return dim


def attention_pallas(queries, keys, values, scale=None,
                     l_tile=256, s_tile=512):
    """queries: (N, L, H, D); keys/values: (N, S, H, D). Returns (N, L, H, D)."""
    N, L, H, D = queries.shape
    S = keys.shape[1]
    if scale is None:
        scale = 1.0 / math.sqrt(D)
    HD = H * D

    # Free reshapes (no transposes, no extra HBM passes): NLHD -> (N, L, H*D).
    q = queries.reshape(N, L, HD)
    k = keys.reshape(N, S, HD)
    v = values.reshape(N, S, HD)

    Lt = _pick_tile(L, l_tile)
    St = _pick_tile(S, s_tile)
    grid = (N, L // Lt, S // St)

    kernel = functools.partial(_flash_attn_kernel, scale=scale,
                               num_heads=H, head_dim=D)

    # VMEM budget: double-buffered q/k/v/o blocks + f32 scratch, with headroom.
    itemsize = jnp.dtype(queries.dtype).itemsize
    est = (2 * itemsize * (2 * Lt * HD + 2 * St * HD)       # pipelined blocks
           + 4 * (Lt * HD + 2 * H * Lt)                     # scratch
           + (4 << 20))                                     # headroom
    vmem_limit = int(min(max(est, 16 << 20), 48 << 20))     # safe on v5e..v7x

    out = pl.pallas_call(
        kernel,
        out_shape=jax.ShapeDtypeStruct((N, L, HD), queries.dtype),
        grid_spec=pltpu.PrefetchScalarGridSpec(
            num_scalar_prefetch=0,
            grid=grid,
            in_specs=[
                pl.BlockSpec((1, Lt, HD), lambda n, li, si: (n, li, 0)),
                pl.BlockSpec((1, St, HD), lambda n, li, si: (n, si, 0)),
                pl.BlockSpec((1, St, HD), lambda n, li, si: (n, si, 0)),
            ],
            out_specs=pl.BlockSpec((1, Lt, HD), lambda n, li, si: (n, li, 0)),
            scratch_shapes=[
                pltpu.VMEM((H, Lt, D), jnp.float32),   # output accumulator
                pltpu.VMEM((H, Lt, 1), jnp.float32),   # running max
                pltpu.VMEM((H, Lt, 1), jnp.float32),   # running sum
            ],
        ),
        compiler_params=pltpu.CompilerParams(
            dimension_semantics=("parallel", "parallel", "arbitrary"),
            vmem_limit_bytes=vmem_limit,
        ),
    )(q, k, v)

    return out.reshape(N, L, H, D)


def attention_ref(queries, keys, values, scale=None):
    """Pure-JAX reference mirroring the PyTorch forward."""
    D = queries.shape[-1]
    if scale is None:
        scale = 1.0 / math.sqrt(D)
    scores = jnp.einsum('nlhd,nshd->nhls', queries, keys)
    weights = jax.nn.softmax(scale * scores, axis=-1)
    return jnp.einsum('nhls,nshd->nlhd', weights, values)
    # TODO(synk): nn.Dropout(p=0.0) and attn_mask (mask_flag=False) are no-ops
    # in the reference forward, so they are intentionally not implemented.


if __name__ == "__main__":
    key = jax.random.PRNGKey(0)

    # Test 1: small shapes implied by the module (single KV tile).
    kq, kk, kv = jax.random.split(key, 3)
    N, L, S, H, D = 2, 8, 8, 4, 32
    q1 = jax.random.normal(kq, (N, L, H, D), dtype=jnp.float32)
    k1 = jax.random.normal(kk, (N, S, H, D), dtype=jnp.float32)
    v1 = jax.random.normal(kv, (N, S, H, D), dtype=jnp.float32)
    out1 = jax.block_until_ready(attention_pallas(q1, k1, v1))
    ref1 = attention_ref(q1, k1, v1)
    assert out1.shape == (N, L, H, D)
    assert jnp.allclose(out1, ref1, atol=2e-3, rtol=2e-3), "mismatch (test 1)"

    # Test 2: force multi-tile L / S grid to exercise the flash accumulation.
    kq2, kk2, kv2 = jax.random.split(jax.random.PRNGKey(1), 3)
    N2, L2, S2 = 2, 64, 128
    q2 = jax.random.normal(kq2, (N2, L2, H, D), dtype=jnp.float32)
    k2 = jax.random.normal(kk2, (N2, S2, H, D), dtype=jnp.float32)
    v2 = jax.random.normal(kv2, (N2, S2, H, D), dtype=jnp.float32)
    out2 = jax.block_until_ready(
        attention_pallas(q2, k2, v2, l_tile=32, s_tile=64))
    ref2 = attention_ref(q2, k2, v2)
    assert out2.shape == (N2, L2, H, D)
    assert jnp.allclose(out2, ref2, atol=2e-3, rtol=2e-3), "mismatch (test 2)"

    print("KERNEL_OK")
</pallas_src>

<mosaic_0001>
module attributes {stable_mosaic.version = 11 : i64} {
  func.func @_flash_attn_kernel(%arg0: i32, %arg1: i32, %arg2: i32, %arg3: memref<1x8x128xf32, #tpu.memory_space<vmem>>, %arg4: memref<1x8x128xf32, #tpu.memory_space<vmem>>, %arg5: memref<1x8x128xf32, #tpu.memory_space<vmem>>, %arg6: memref<1x8x128xf32, #tpu.memory_space<vmem>>, %arg7: memref<4x8x32xf32, #tpu.memory_space<vmem>>, %arg8: memref<4x8x1xf32, #tpu.memory_space<vmem>>, %arg9: memref<4x8x1xf32, #tpu.memory_space<vmem>>) attributes {dimension_semantics = [#tpu.dimension_semantics<parallel>, #tpu.dimension_semantics<parallel>, #tpu.dimension_semantics<arbitrary>], iteration_bounds = array<i64: 2, 1, 1>, scalar_prefetch = 0 : i64, scratch_operands = 3 : i64, tpu.core_type = #tpu.core_type<tc>, window_params = [{transform_indices = @transform_0, window_bounds = array<i64: 1, 8, 128>}, {transform_indices = @transform_1, window_bounds = array<i64: 1, 8, 128>}, {transform_indices = @transform_2, window_bounds = array<i64: 1, 8, 128>}, {transform_indices = @transform_3, window_bounds = array<i64: 1, 8, 128>}]} {
    %c0_i32 = arith.constant 0 : i32
    %0 = arith.cmpi eq, %arg2, %c0_i32 : i32
    %1 = arith.extui %0 : i1 to i32
    %c0_i32_0 = arith.constant 0 : i32
    %2 = arith.cmpi ne, %1, %c0_i32_0 : i32
    scf.if %2 {
      %cst_96 = arith.constant 0xFF800000 : f32
      %154 = vector.broadcast %cst_96 : f32 to vector<4x8x1xf32>
      %c0_97 = arith.constant 0 : index
      %c0_98 = arith.constant 0 : index
      %c0_99 = arith.constant 0 : index
      %155 = vector.load %arg8[%c0_97, %c0_98, %c0_99] : memref<4x8x1xf32, #tpu.memory_space<vmem>>, vector<4x8x1xf32>
      tpu.vector_store %arg8[%c0_97, %c0_98, %c0_99], %154 {strides = array<i32>} : memref<4x8x1xf32, #tpu.memory_space<vmem>>, vector<4x8x1xf32>,
      %cst_100 = arith.constant 0.000000e+00 : f32
      %156 = vector.broadcast %cst_100 : f32 to vector<4x8x1xf32>
      %c0_101 = arith.constant 0 : index
      %c0_102 = arith.constant 0 : index
      %c0_103 = arith.constant 0 : index
      %157 = vector.load %arg9[%c0_101, %c0_102, %c0_103] : memref<4x8x1xf32, #tpu.memory_space<vmem>>, vector<4x8x1xf32>
      tpu.vector_store %arg9[%c0_101, %c0_102, %c0_103], %156 {strides = array<i32>} : memref<4x8x1xf32, #tpu.memory_space<vmem>>, vector<4x8x1xf32>,
      %cst_104 = arith.constant 0.000000e+00 : f32
      %158 = vector.broadcast %cst_104 : f32 to vector<4x8x32xf32>
      %c0_105 = arith.constant 0 : index
      %c0_106 = arith.constant 0 : index
      %c0_107 = arith.constant 0 : index
      %159 = vector.load %arg7[%c0_105, %c0_106, %c0_107] : memref<4x8x32xf32, #tpu.memory_space<vmem>>, vector<4x8x32xf32>
      tpu.vector_store %arg7[%c0_105, %c0_106, %c0_107], %158 {strides = array<i32>} : memref<4x8x32xf32, #tpu.memory_space<vmem>>, vector<4x8x32xf32>,
    } else {
    }
    %c0 = arith.constant 0 : index
    %c0_1 = arith.constant 0 : index
    %c0_2 = arith.constant 0 : index
    %3 = vector.load %arg3[%c0, %c0_1, %c0_2] : memref<1x8x128xf32, #tpu.memory_space<vmem>>, vector<1x8x128xf32>
    %4 = vector.shape_cast %3 : vector<1x8x128xf32> to vector<8x128xf32>
    %cst = arith.constant 0.176776692 : f32
    %5 = vector.broadcast %cst : f32 to vector<8x128xf32>
    %6 = arith.mulf %4, %5 : vector<8x128xf32>
    %c0_3 = arith.constant 0 : index
    %c0_4 = arith.constant 0 : index
    %c0_5 = arith.constant 0 : index
    %7 = vector.load %arg4[%c0_3, %c0_4, %c0_5] : memref<1x8x128xf32, #tpu.memory_space<vmem>>, vector<1x8x128xf32>
    %8 = vector.shape_cast %7 : vector<1x8x128xf32> to vector<8x128xf32>
    %c0_6 = arith.constant 0 : index
    %c0_7 = arith.constant 0 : index
    %c0_8 = arith.constant 0 : index
    %9 = vector.load %arg5[%c0_6, %c0_7, %c0_8] : memref<1x8x128xf32, #tpu.memory_space<vmem>>, vector<1x8x128xf32>
    %10 = vector.shape_cast %9 : vector<1x8x128xf32> to vector<8x128xf32>
    %11 = vector.extract_strided_slice %6 {offsets = [0, 0], sizes = [8, 32], strides = [1, 1]} : vector<8x128xf32> to vector<8x32xf32>
    %12 = vector.extract_strided_slice %8 {offsets = [0, 0], sizes = [8, 32], strides = [1, 1]} : vector<8x128xf32> to vector<8x32xf32>
    %13 = vector.extract_strided_slice %10 {offsets = [0, 0], sizes = [8, 32], strides = [1, 1]} : vector<8x128xf32> to vector<8x32xf32>
    %cst_9 = arith.constant dense<0.000000e+00> : vector<8x8xf32>
    %14 = tpu.matmul %11, %12, %cst_9 {dimension_numbers = #tpu.dot_dimension_numbers<[1], [1], [0], [0], [0, 0, 1, 0], [], []>} : vector<8x32xf32>, vector<8x32xf32>, vector<8x8xf32> -> vector<8x8xf32>
    %c0_10 = arith.constant 0 : index
    %c0_11 = arith.constant 0 : index
    %c0_12 = arith.constant 0 : index
    %15 = vector.load %arg8[%c0_10, %c0_11, %c0_12] : memref<4x8x1xf32, #tpu.memory_space<vmem>>, vector<1x8x1xf32>
    %16 = vector.shape_cast %15 : vector<1x8x1xf32> to vector<8x1xf32>
    %cst_13 = arith.constant dense<0xFF800000> : vector<8xf32>
    %17 = vector.multi_reduction <maximumf>, %14, %cst_13 [1] : vector<8x8xf32> to vector<8xf32>
    %18 = vector.shape_cast %17 : vector<8xf32> to vector<8x1xf32>
    %19 = arith.maximumf %16, %18 : vector<8x1xf32>
    %20 = arith.subf %16, %19 : vector<8x1xf32>
    %21 = math.exp %20 : vector<8x1xf32>
    %22 = vector.broadcast %19 : vector<8x1xf32> to vector<8x8xf32>
    %23 = arith.subf %14, %22 : vector<8x8xf32>
    %24 = math.exp %23 : vector<8x8xf32>
    %c0_14 = arith.constant 0 : index
    %c0_15 = arith.constant 0 : index
    %c0_16 = arith.constant 0 : index
    %25 = vector.load %arg9[%c0_14, %c0_15, %c0_16] : memref<4x8x1xf32, #tpu.memory_space<vmem>>, vector<1x8x1xf32>
    %26 = vector.shape_cast %25 : vector<1x8x1xf32> to vector<8x1xf32>
    %27 = arith.mulf %21, %26 : vector<8x1xf32>
    %cst_17 = arith.constant dense<0.000000e+00> : vector<8xf32>
    %28 = vector.multi_reduction <add>, %24, %cst_17 [1] : vector<8x8xf32> to vector<8xf32>
    %29 = vector.shape_cast %28 : vector<8xf32> to vector<8x1xf32>
    %30 = arith.addf %27, %29 : vector<8x1xf32>
    %c0_18 = arith.constant 0 : index
    %c0_19 = arith.constant 0 : index
    %c0_20 = arith.constant 0 : index
    %31 = vector.load %arg9[%c0_18, %c0_19, %c0_20] : memref<4x8x1xf32, #tpu.memory_space<vmem>>, vector<1x8x1xf32>
    %32 = vector.shape_cast %31 : vector<1x8x1xf32> to vector<8x1xf32>
    %33 = vector.shape_cast %30 : vector<8x1xf32> to vector<1x8x1xf32>
    tpu.vector_store %arg9[%c0_18, %c0_19, %c0_20], %33 {strides = array<i32>} : memref<4x8x1xf32, #tpu.memory_space<vmem>>, vector<1x8x1xf32>,
    %c0_21 = arith.constant 0 : index
    %c0_22 = arith.constant 0 : index
    %c0_23 = arith.constant 0 : index
    %34 = vector.load %arg7[%c0_21, %c0_22, %c0_23] : memref<4x8x32xf32, #tpu.memory_space<vmem>>, vector<1x8x32xf32>
    %35 = vector.shape_cast %34 : vector<1x8x32xf32> to vector<8x32xf32>
    %36 = vector.broadcast %21 : vector<8x1xf32> to vector<8x32xf32>
    %37 = arith.mulf %36, %35 : vector<8x32xf32>
    %cst_24 = arith.constant dense<0.000000e+00> : vector<8x32xf32>
    %38 = tpu.matmul %24, %13, %cst_24 {dimension_numbers = #tpu.dot_dimension_numbers<[1], [0], [0], [1], [0, 0, 1, 1], [], []>} : vector<8x8xf32>, vector<8x32xf32>, vector<8x32xf32> -> vector<8x32xf32>
    %39 = arith.addf %37, %38 : vector<8x32xf32>
    %c0_25 = arith.constant 0 : index
    %c0_26 = arith.constant 0 : index
    %c0_27 = arith.constant 0 : index
    %40 = vector.load %arg7[%c0_25, %c0_26, %c0_27] : memref<4x8x32xf32, #tpu.memory_space<vmem>>, vector<1x8x32xf32>
    %41 = vector.shape_cast %40 : vector<1x8x32xf32> to vector<8x32xf32>
    %42 = vector.shape_cast %39 : vector<8x32xf32> to vector<1x8x32xf32>
    tpu.vector_store %arg7[%c0_25, %c0_26, %c0_27], %42 {strides = array<i32>} : memref<4x8x32xf32, #tpu.memory_space<vmem>>, vector<1x8x32xf32>,
    %c0_28 = arith.constant 0 : index
    %c0_29 = arith.constant 0 : index
    %c0_30 = arith.constant 0 : index
    %43 = vector.load %arg8[%c0_28, %c0_29, %c0_30] : memref<4x8x1xf32, #tpu.memory_space<vmem>>, vector<1x8x1xf32>
    %44 = vector.shape_cast %43 : vector<1x8x1xf32> to vector<8x1xf32>
    %45 = vector.shape_cast %19 : vector<8x1xf32> to vector<1x8x1xf32>
    tpu.vector_store %arg8[%c0_28, %c0_29, %c0_30], %45 {strides = array<i32>} : memref<4x8x1xf32, #tpu.memory_space<vmem>>, vector<1x8x1xf32>,
    %46 = vector.extract_strided_slice %6 {offsets = [0, 32], sizes = [8, 32], strides = [1, 1]} : vector<8x128xf32> to vector<8x32xf32>
    %47 = vector.extract_strided_slice %8 {offsets = [0, 32], sizes = [8, 32], strides = [1, 1]} : vector<8x128xf32> to vector<8x32xf32>
    %48 = vector.extract_strided_slice %10 {offsets = [0, 32], sizes = [8, 32], strides = [1, 1]} : vector<8x128xf32> to vector<8x32xf32>
    %cst_31 = arith.constant dense<0.000000e+00> : vector<8x8xf32>
    %49 = tpu.matmul %46, %47, %cst_31 {dimension_numbers = #tpu.dot_dimension_numbers<[1], [1], [0], [0], [0, 0, 1, 0], [], []>} : vector<8x32xf32>, vector<8x32xf32>, vector<8x8xf32> -> vector<8x8xf32>
    %c1 = arith.constant 1 : index
    %c0_32 = arith.constant 0 : index
    %c0_33 = arith.constant 0 : index
    %50 = vector.load %arg8[%c1, %c0_32, %c0_33] : memref<4x8x1xf32, #tpu.memory_space<vmem>>, vector<1x8x1xf32>
    %51 = vector.shape_cast %50 : vector<1x8x1xf32> to vector<8x1xf32>
    %cst_34 = arith.constant dense<0xFF800000> : vector<8xf32>
    %52 = vector.multi_reduction <maximumf>, %49, %cst_34 [1] : vector<8x8xf32> to vector<8xf32>
    %53 = vector.shape_cast %52 : vector<8xf32> to vector<8x1xf32>
    %54 = arith.maximumf %51, %53 : vector<8x1xf32>
    %55 = arith.subf %51, %54 : vector<8x1xf32>
    %56 = math.exp %55 : vector<8x1xf32>
    %57 = vector.broadcast %54 : vector<8x1xf32> to vector<8x8xf32>
    %58 = arith.subf %49, %57 : vector<8x8xf32>
    %59 = math.exp %58 : vector<8x8xf32>
    %c1_35 = arith.constant 1 : index
    %c0_36 = arith.constant 0 : index
    %c0_37 = arith.constant 0 : index
    %60 = vector.load %arg9[%c1_35, %c0_36, %c0_37] : memref<4x8x1xf32, #tpu.memory_space<vmem>>, vector<1x8x1xf32>
    %61 = vector.shape_cast %60 : vector<1x8x1xf32> to vector<8x1xf32>
    %62 = arith.mulf %56, %61 : vector<8x1xf32>
    %cst_38 = arith.constant dense<0.000000e+00> : vector<8xf32>
    %63 = vector.multi_reduction <add>, %59, %cst_38 [1] : vector<8x8xf32> to vector<8xf32>
    %64 = vector.shape_cast %63 : vector<8xf32> to vector<8x1xf32>
    %65 = arith.addf %62, %64 : vector<8x1xf32>
    %c1_39 = arith.constant 1 : index
    %c0_40 = arith.constant 0 : index
    %c0_41 = arith.constant 0 : index
    %66 = vector.load %arg9[%c1_39, %c0_40, %c0_41] : memref<4x8x1xf32, #tpu.memory_space<vmem>>, vector<1x8x1xf32>
    %67 = vector.shape_cast %66 : vector<1x8x1xf32> to vector<8x1xf32>
    %68 = vector.shape_cast %65 : vector<8x1xf32> to vector<1x8x1xf32>
    tpu.vector_store %arg9[%c1_39, %c0_40, %c0_41], %68 {strides = array<i32>} : memref<4x8x1xf32, #tpu.memory_space<vmem>>, vector<1x8x1xf32>,
    %c1_42 = arith.constant 1 : index
    %c0_43 = arith.constant 0 : index
    %c0_44 = arith.constant 0 : index
    %69 = vector.load %arg7[%c1_42, %c0_43, %c0_44] : memref<4x8x32xf32, #tpu.memory_space<vmem>>, vector<1x8x32xf32>
    %70 = vector.shape_cast %69 : vector<1x8x32xf32> to vector<8x32xf32>
    %71 = vector.broadcast %56 : vector<8x1xf32> to vector<8x32xf32>
    %72 = arith.mulf %71, %70 : vector<8x32xf32>
    %cst_45 = arith.constant dense<0.000000e+00> : vector<8x32xf32>
    %73 = tpu.matmul %59, %48, %cst_45 {dimension_numbers = #tpu.dot_dimension_numbers<[1], [0], [0], [1], [0, 0, 1, 1], [], []>} : vector<8x8xf32>, vector<8x32xf32>, vector<8x32xf32> -> vector<8x32xf32>
    %74 = arith.addf %72, %73 : vector<8x32xf32>
    %c1_46 = arith.constant 1 : index
    %c0_47 = arith.constant 0 : index
    %c0_48 = arith.constant 0 : index
    %75 = vector.load %arg7[%c1_46, %c0_47, %c0_48] : memref<4x8x32xf32, #tpu.memory_space<vmem>>, vector<1x8x32xf32>
    %76 = vector.shape_cast %75 : vector<1x8x32xf32> to vector<8x32xf32>
    %77 = vector.shape_cast %74 : vector<8x32xf32> to vector<1x8x32xf32>
    tpu.vector_store %arg7[%c1_46, %c0_47, %c0_48], %77 {strides = array<i32>} : memref<4x8x32xf32, #tpu.memory_space<vmem>>, vector<1x8x32xf32>,
    %c1_49 = arith.constant 1 : index
    %c0_50 = arith.constant 0 : index
    %c0_51 = arith.constant 0 : index
    %78 = vector.load %arg8[%c1_49, %c0_50, %c0_51] : memref<4x8x1xf32, #tpu.memory_space<vmem>>, vector<1x8x1xf32>
    %79 = vector.shape_cast %78 : vector<1x8x1xf32> to vector<8x1xf32>
    %80 = vector.shape_cast %54 : vector<8x1xf32> to vector<1x8x1xf32>
    tpu.vector_store %arg8[%c1_49, %c0_50, %c0_51], %80 {strides = array<i32>} : memref<4x8x1xf32, #tpu.memory_space<vmem>>, vector<1x8x1xf32>,
    %81 = vector.extract_strided_slice %6 {offsets = [0, 64], sizes = [8, 32], strides = [1, 1]} : vector<8x128xf32> to vector<8x32xf32>
    %82 = vector.extract_strided_slice %8 {offsets = [0, 64], sizes = [8, 32], strides = [1, 1]} : vector<8x128xf32> to vector<8x32xf32>
    %83 = vector.extract_strided_slice %10 {offsets = [0, 64], sizes = [8, 32], strides = [1, 1]} : vector<8x128xf32> to vector<8x32xf32>
    %cst_52 = arith.constant dense<0.000000e+00> : vector<8x8xf32>
    %84 = tpu.matmul %81, %82, %cst_52 {dimension_numbers = #tpu.dot_dimension_numbers<[1], [1], [0], [0], [0, 0, 1, 0], [], []>} : vector<8x32xf32>, vector<8x32xf32>, vector<8x8xf32> -> vector<8x8xf32>
    %c2 = arith.constant 2 : index
    %c0_53 = arith.constant 0 : index
    %c0_54 = arith.constant 0 : index
    %85 = vector.load %arg8[%c2, %c0_53, %c0_54] : memref<4x8x1xf32, #tpu.memory_space<vmem>>, vector<1x8x1xf32>
    %86 = vector.shape_cast %85 : vector<1x8x1xf32> to vector<8x1xf32>
    %cst_55 = arith.constant dense<0xFF800000> : vector<8xf32>
    %87 = vector.multi_reduction <maximumf>, %84, %cst_55 [1] : vector<8x8xf32> to vector<8xf32>
    %88 = vector.shape_cast %87 : vector<8xf32> to vector<8x1xf32>
    %89 = arith.maximumf %86, %88 : vector<8x1xf32>
    %90 = arith.subf %86, %89 : vector<8x1xf32>
    %91 = math.exp %90 : vector<8x1xf32>
    %92 = vector.broadcast %89 : vector<8x1xf32> to vector<8x8xf32>
    %93 = arith.subf %84, %92 : vector<8x8xf32>
    %94 = math.exp %93 : vector<8x8xf32>
    %c2_56 = arith.constant 2 : index
    %c0_57 = arith.constant 0 : index
    %c0_58 = arith.constant 0 : index
    %95 = vector.load %arg9[%c2_56, %c0_57, %c0_58] : memref<4x8x1xf32, #tpu.memory_space<vmem>>, vector<1x8x1xf32>
    %96 = vector.shape_cast %95 : vector<1x8x1xf32> to vector<8x1xf32>
    %97 = arith.mulf %91, %96 : vector<8x1xf32>
    %cst_59 = arith.constant dense<0.000000e+00> : vector<8xf32>
    %98 = vector.multi_reduction <add>, %94, %cst_59 [1] : vector<8x8xf32> to vector<8xf32>
    %99 = vector.shape_cast %98 : vector<8xf32> to vector<8x1xf32>
    %100 = arith.addf %97, %99 : vector<8x1xf32>
    %c2_60 = arith.constant 2 : index
    %c0_61 = arith.constant 0 : index
    %c0_62 = arith.constant 0 : index
    %101 = vector.load %arg9[%c2_60, %c0_61, %c0_62] : memref<4x8x1xf32, #tpu.memory_space<vmem>>, vector<1x8x1xf32>
    %102 = vector.shape_cast %101 : vector<1x8x1xf32> to vector<8x1xf32>
    %103 = vector.shape_cast %100 : vector<8x1xf32> to vector<1x8x1xf32>
    tpu.vector_store %arg9[%c2_60, %c0_61, %c0_62], %103 {strides = array<i32>} : memref<4x8x1xf32, #tpu.memory_space<vmem>>, vector<1x8x1xf32>,
    %c2_63 = arith.constant 2 : index
    %c0_64 = arith.constant 0 : index
    %c0_65 = arith.constant 0 : index
    %104 = vector.load %arg7[%c2_63, %c0_64, %c0_65] : memref<4x8x32xf32, #tpu.memory_space<vmem>>, vector<1x8x32xf32>
    %105 = vector.shape_cast %104 : vector<1x8x32xf32> to vector<8x32xf32>
    %106 = vector.broadcast %91 : vector<8x1xf32> to vector<8x32xf32>
    %107 = arith.mulf %106, %105 : vector<8x32xf32>
    %cst_66 = arith.constant dense<0.000000e+00> : vector<8x32xf32>
    %108 = tpu.matmul %94, %83, %cst_66 {dimension_numbers = #tpu.dot_dimension_numbers<[1], [0], [0], [1], [0, 0, 1, 1], [], []>} : vector<8x8xf32>, vector<8x32xf32>, vector<8x32xf32> -> vector<8x32xf32>
    %109 = arith.addf %107, %108 : vector<8x32xf32>
    %c2_67 = arith.constant 2 : index
    %c0_68 = arith.constant 0 : index
    %c0_69 = arith.constant 0 : index
    %110 = vector.load %arg7[%c2_67, %c0_68, %c0_69] : memref<4x8x32xf32, #tpu.memory_space<vmem>>, vector<1x8x32xf32>
    %111 = vector.shape_cast %110 : vector<1x8x32xf32> to vector<8x32xf32>
    %112 = vector.shape_cast %109 : vector<8x32xf32> to vector<1x8x32xf32>
    tpu.vector_store %arg7[%c2_67, %c0_68, %c0_69], %112 {strides = array<i32>} : memref<4x8x32xf32, #tpu.memory_space<vmem>>, vector<1x8x32xf32>,
    %c2_70 = arith.constant 2 : index
    %c0_71 = arith.constant 0 : index
    %c0_72 = arith.constant 0 : index
    %113 = vector.load %arg8[%c2_70, %c0_71, %c0_72] : memref<4x8x1xf32, #tpu.memory_space<vmem>>, vector<1x8x1xf32>
    %114 = vector.shape_cast %113 : vector<1x8x1xf32> to vector<8x1xf32>
    %115 = vector.shape_cast %89 : vector<8x1xf32> to vector<1x8x1xf32>
    tpu.vector_store %arg8[%c2_70, %c0_71, %c0_72], %115 {strides = array<i32>} : memref<4x8x1xf32, #tpu.memory_space<vmem>>, vector<1x8x1xf32>,
    %116 = vector.extract_strided_slice %6 {offsets = [0, 96], sizes = [8, 32], strides = [1, 1]} : vector<8x128xf32> to vector<8x32xf32>
    %117 = vector.extract_strided_slice %8 {offsets = [0, 96], sizes = [8, 32], strides = [1, 1]} : vector<8x128xf32> to vector<8x32xf32>
    %118 = vector.extract_strided_slice %10 {offsets = [0, 96], sizes = [8, 32], strides = [1, 1]} : vector<8x128xf32> to vector<8x32xf32>
    %cst_73 = arith.constant dense<0.000000e+00> : vector<8x8xf32>
    %119 = tpu.matmul %116, %117, %cst_73 {dimension_numbers = #tpu.dot_dimension_numbers<[1], [1], [0], [0], [0, 0, 1, 0], [], []>} : vector<8x32xf32>, vector<8x32xf32>, vector<8x8xf32> -> vector<8x8xf32>
    %c3 = arith.constant 3 : index
    %c0_74 = arith.constant 0 : index
    %c0_75 = arith.constant 0 : index
    %120 = vector.load %arg8[%c3, %c0_74, %c0_75] : memref<4x8x1xf32, #tpu.memory_space<vmem>>, vector<1x8x1xf32>
    %121 = vector.shape_cast %120 : vector<1x8x1xf32> to vector<8x1xf32>
    %cst_76 = arith.constant dense<0xFF800000> : vector<8xf32>
    %122 = vector.multi_reduction <maximumf>, %119, %cst_76 [1] : vector<8x8xf32> to vector<8xf32>
    %123 = vector.shape_cast %122 : vector<8xf32> to vector<8x1xf32>
    %124 = arith.maximumf %121, %123 : vector<8x1xf32>
    %125 = arith.subf %121, %124 : vector<8x1xf32>
    %126 = math.exp %125 : vector<8x1xf32>
    %127 = vector.broadcast %124 : vector<8x1xf32> to vector<8x8xf32>
    %128 = arith.subf %119, %127 : vector<8x8xf32>
    %129 = math.exp %128 : vector<8x8xf32>
    %c3_77 = arith.constant 3 : index
    %c0_78 = arith.constant 0 : index
    %c0_79 = arith.constant 0 : index
    %130 = vector.load %arg9[%c3_77, %c0_78, %c0_79] : memref<4x8x1xf32, #tpu.memory_space<vmem>>, vector<1x8x1xf32>
    %131 = vector.shape_cast %130 : vector<1x8x1xf32> to vector<8x1xf32>
    %132 = arith.mulf %126, %131 : vector<8x1xf32>
    %cst_80 = arith.constant dense<0.000000e+00> : vector<8xf32>
    %133 = vector.multi_reduction <add>, %129, %cst_80 [1] : vector<8x8xf32> to vector<8xf32>
    %134 = vector.shape_cast %133 : vector<8xf32> to vector<8x1xf32>
    %135 = arith.addf %132, %134 : vector<8x1xf32>
    %c3_81 = arith.constant 3 : index
    %c0_82 = arith.constant 0 : index
    %c0_83 = arith.constant 0 : index
    %136 = vector.load %arg9[%c3_81, %c0_82, %c0_83] : memref<4x8x1xf32, #tpu.memory_space<vmem>>, vector<1x8x1xf32>
    %137 = vector.shape_cast %136 : vector<1x8x1xf32> to vector<8x1xf32>
    %138 = vector.shape_cast %135 : vector<8x1xf32> to vector<1x8x1xf32>
    tpu.vector_store %arg9[%c3_81, %c0_82, %c0_83], %138 {strides = array<i32>} : memref<4x8x1xf32, #tpu.memory_space<vmem>>, vector<1x8x1xf32>,
    %c3_84 = arith.constant 3 : index
    %c0_85 = arith.constant 0 : index
    %c0_86 = arith.constant 0 : index
    %139 = vector.load %arg7[%c3_84, %c0_85, %c0_86] : memref<4x8x32xf32, #tpu.memory_space<vmem>>, vector<1x8x32xf32>
    %140 = vector.shape_cast %139 : vector<1x8x32xf32> to vector<8x32xf32>
    %141 = vector.broadcast %126 : vector<8x1xf32> to vector<8x32xf32>
    %142 = arith.mulf %141, %140 : vector<8x32xf32>
    %cst_87 = arith.constant dense<0.000000e+00> : vector<8x32xf32>
    %143 = tpu.matmul %129, %118, %cst_87 {dimension_numbers = #tpu.dot_dimension_numbers<[1], [0], [0], [1], [0, 0, 1, 1], [], []>} : vector<8x8xf32>, vector<8x32xf32>, vector<8x32xf32> -> vector<8x32xf32>
    %144 = arith.addf %142, %143 : vector<8x32xf32>
    %c3_88 = arith.constant 3 : index
    %c0_89 = arith.constant 0 : index
    %c0_90 = arith.constant 0 : index
    %145 = vector.load %arg7[%c3_88, %c0_89, %c0_90] : memref<4x8x32xf32, #tpu.memory_space<vmem>>, vector<1x8x32xf32>
    %146 = vector.shape_cast %145 : vector<1x8x32xf32> to vector<8x32xf32>
    %147 = vector.shape_cast %144 : vector<8x32xf32> to vector<1x8x32xf32>
    tpu.vector_store %arg7[%c3_88, %c0_89, %c0_90], %147 {strides = array<i32>} : memref<4x8x32xf32, #tpu.memory_space<vmem>>, vector<1x8x32xf32>,
    %c3_91 = arith.constant 3 : index
    %c0_92 = arith.constant 0 : index
    %c0_93 = arith.constant 0 : index
    %148 = vector.load %arg8[%c3_91, %c0_92, %c0_93] : memref<4x8x1xf32, #tpu.memory_space<vmem>>, vector<1x8x1xf32>
    %149 = vector.shape_cast %148 : vector<1x8x1xf32> to vector<8x1xf32>
    %150 = vector.shape_cast %124 : vector<8x1xf32> to vector<1x8x1xf32>
    tpu.vector_store %arg8[%c3_91, %c0_92, %c0_93], %150 {strides = array<i32>} : memref<4x8x1xf32, #tpu.memory_space<vmem>>, vector<1x8x1xf32>,
    %c0_i32_94 = arith.constant 0 : i32
    %151 = arith.cmpi eq, %arg2, %c0_i32_94 : i32
    %152 = arith.extui %151 : i1 to i32
    %c0_i32_95 = arith.constant 0 : i32
    %153 = arith.cmpi ne, %152, %c0_i32_95 : i32
    scf.if %153 {
      %c0_96 = arith.constant 0 : index
      %c0_97 = arith.constant 0 : index
      %c0_98 = arith.constant 0 : index
      %154 = vector.load %arg9[%c0_96, %c0_97, %c0_98] : memref<4x8x1xf32, #tpu.memory_space<vmem>>, vector<1x8x1xf32>
      %155 = vector.shape_cast %154 : vector<1x8x1xf32> to vector<8x1xf32>
      %156 = tpu.reciprocal %155 {approx = true} : vector<8x1xf32> -> vector<8x1xf32>
      %157 = arith.mulf %155, %156 : vector<8x1xf32>
      %cst_99 = arith.constant 2.000000e+00 : f32
      %158 = vector.broadcast %cst_99 : f32 to vector<8x1xf32>
      %159 = arith.subf %158, %157 : vector<8x1xf32>
      %160 = arith.mulf %156, %159 : vector<8x1xf32>
      %c0_100 = arith.constant 0 : index
      %c0_101 = arith.constant 0 : index
      %c0_102 = arith.constant 0 : index
      %161 = vector.load %arg7[%c0_100, %c0_101, %c0_102] : memref<4x8x32xf32, #tpu.memory_space<vmem>>, vector<1x8x32xf32>
      %162 = vector.shape_cast %161 : vector<1x8x32xf32> to vector<8x32xf32>
      %163 = vector.broadcast %160 : vector<8x1xf32> to vector<8x32xf32>
      %164 = arith.mulf %162, %163 : vector<8x32xf32>
      %c1_103 = arith.constant 1 : index
      %c0_104 = arith.constant 0 : index
      %c0_105 = arith.constant 0 : index
      %165 = vector.load %arg9[%c1_103, %c0_104, %c0_105] : memref<4x8x1xf32, #tpu.memory_space<vmem>>, vector<1x8x1xf32>
      %166 = vector.shape_cast %165 : vector<1x8x1xf32> to vector<8x1xf32>
      %167 = tpu.reciprocal %166 {approx = true} : vector<8x1xf32> -> vector<8x1xf32>
      %168 = arith.mulf %166, %167 : vector<8x1xf32>
      %cst_106 = arith.constant 2.000000e+00 : f32
      %169 = vector.broadcast %cst_106 : f32 to vector<8x1xf32>
      %170 = arith.subf %169, %168 : vector<8x1xf32>
      %171 = arith.mulf %167, %170 : vector<8x1xf32>
      %c1_107 = arith.constant 1 : index
      %c0_108 = arith.constant 0 : index
      %c0_109 = arith.constant 0 : index
      %172 = vector.load %arg7[%c1_107, %c0_108, %c0_109] : memref<4x8x32xf32, #tpu.memory_space<vmem>>, vector<1x8x32xf32>
      %173 = vector.shape_cast %172 : vector<1x8x32xf32> to vector<8x32xf32>
      %174 = vector.broadcast %171 : vector<8x1xf32> to vector<8x32xf32>
      %175 = arith.mulf %173, %174 : vector<8x32xf32>
      %c2_110 = arith.constant 2 : index
      %c0_111 = arith.constant 0 : index
      %c0_112 = arith.constant 0 : index
      %176 = vector.load %arg9[%c2_110, %c0_111, %c0_112] : memref<4x8x1xf32, #tpu.memory_space<vmem>>, vector<1x8x1xf32>
      %177 = vector.shape_cast %176 : vector<1x8x1xf32> to vector<8x1xf32>
      %178 = tpu.reciprocal %177 {approx = true} : vector<8x1xf32> -> vector<8x1xf32>
      %179 = arith.mulf %177, %178 : vector<8x1xf32>
      %cst_113 = arith.constant 2.000000e+00 : f32
      %180 = vector.broadcast %cst_113 : f32 to vector<8x1xf32>
      %181 = arith.subf %180, %179 : vector<8x1xf32>
      %182 = arith.mulf %178, %181 : vector<8x1xf32>
      %c2_114 = arith.constant 2 : index
      %c0_115 = arith.constant 0 : index
      %c0_116 = arith.constant 0 : index
      %183 = vector.load %arg7[%c2_114, %c0_115, %c0_116] : memref<4x8x32xf32, #tpu.memory_space<vmem>>, vector<1x8x32xf32>
      %184 = vector.shape_cast %183 : vector<1x8x32xf32> to vector<8x32xf32>
      %185 = vector.broadcast %182 : vector<8x1xf32> to vector<8x32xf32>
      %186 = arith.mulf %184, %185 : vector<8x32xf32>
      %c3_117 = arith.constant 3 : index
      %c0_118 = arith.constant 0 : index
      %c0_119 = arith.constant 0 : index
      %187 = vector.load %arg9[%c3_117, %c0_118, %c0_119] : memref<4x8x1xf32, #tpu.memory_space<vmem>>, vector<1x8x1xf32>
      %188 = vector.shape_cast %187 : vector<1x8x1xf32> to vector<8x1xf32>
      %189 = tpu.reciprocal %188 {approx = true} : vector<8x1xf32> -> vector<8x1xf32>
      %190 = arith.mulf %188, %189 : vector<8x1xf32>
      %cst_120 = arith.constant 2.000000e+00 : f32
      %191 = vector.broadcast %cst_120 : f32 to vector<8x1xf32>
      %192 = arith.subf %191, %190 : vector<8x1xf32>
      %193 = arith.mulf %189, %192 : vector<8x1xf32>
      %c3_121 = arith.constant 3 : index
      %c0_122 = arith.constant 0 : index
      %c0_123 = arith.constant 0 : index
      %194 = vector.load %arg7[%c3_121, %c0_122, %c0_123] : memref<4x8x32xf32, #tpu.memory_space<vmem>>, vector<1x8x32xf32>
      %195 = vector.shape_cast %194 : vector<1x8x32xf32> to vector<8x32xf32>
      %196 = vector.broadcast %193 : vector<8x1xf32> to vector<8x32xf32>
      %197 = arith.mulf %195, %196 : vector<8x32xf32>
      %198 = tpu.concatenate %164, %175, %186, %197 in 1 : vector<8x32xf32>, vector<8x32xf32>, vector<8x32xf32>, vector<8x32xf32> -> vector<8x128xf32>
      %c0_124 = arith.constant 0 : index
      %c0_125 = arith.constant 0 : index
      %c0_126 = arith.constant 0 : index
      %199 = vector.load %arg6[%c0_124, %c0_125, %c0_126] : memref<1x8x128xf32, #tpu.memory_space<vmem>>, vector<1x8x128xf32>
      %200 = vector.shape_cast %199 : vector<1x8x128xf32> to vector<8x128xf32>
      %201 = vector.shape_cast %198 : vector<8x128xf32> to vector<1x8x128xf32>
      tpu.vector_store %arg6[%c0_124, %c0_125, %c0_126], %201 {strides = array<i32>} : memref<1x8x128xf32, #tpu.memory_space<vmem>>, vector<1x8x128xf32>,
    } else {
    }
    return
  }
  func.func @transform_0(%arg0: i32, %arg1: i32, %arg2: i32) -> (i32, i32, i32) {
    %c0_i32 = arith.constant 0 : i32
    %c0_i32_0 = arith.constant 0 : i32
    return %arg0, %arg1, %c0_i32 : i32, i32, i32
  }
  func.func @transform_1(%arg0: i32, %arg1: i32, %arg2: i32) -> (i32, i32, i32) {
    %c0_i32 = arith.constant 0 : i32
    %c0_i32_0 = arith.constant 0 : i32
    return %arg0, %arg2, %c0_i32 : i32, i32, i32
  }
  func.func @transform_2(%arg0: i32, %arg1: i32, %arg2: i32) -> (i32, i32, i32) {
    %c0_i32 = arith.constant 0 : i32
    %c0_i32_0 = arith.constant 0 : i32
    return %arg0, %arg2, %c0_i32 : i32, i32, i32
  }
  func.func @transform_3(%arg0: i32, %arg1: i32, %arg2: i32) -> (i32, i32, i32) {
    %c0_i32 = arith.constant 0 : i32
    %c0_i32_0 = arith.constant 0 : i32
    return %arg0, %arg1, %c0_i32 : i32, i32, i32
  }
}

</mosaic_0001>

<llo_original>
// kernel: tpu_custom_call.1
$region0: #{tpu_custom_call.1}
  #allocation0 [shape = 'u32[]', space=smem, size = 0x4, offset = 0x4, fixed_abs, tag = 'smem constant byte address 0x4 - core index']
  #allocation1 [shape = 'u32[144,128]{1,0:T(1,128)}', space=vmem, size = 0x12000, scoped, tag = 'internal scratch']
  #allocation2 [shape = 'f32[4,8,32]{2,1,0:T(8,128)}', space=vmem, size = 0x4000, scoped, tag = 'scratch operand']
  #allocation3 [shape = 'f32[4,8,1]{2,1,0:T(8,128)}', space=vmem, size = 0x4000, scoped, tag = 'scratch operand']
  #allocation4 [shape = 'f32[4,8,1]{2,1,0:T(8,128)}', space=vmem, size = 0x4000, scoped, tag = 'scratch operand']
  %s0 = inlined_call_operand.hbm [shape: f32[2,8,128], index: 0, kind: input, shape index: {}]
  %s1 = inlined_call_operand.hbm [shape: f32[2,8,128], index: 1, kind: input, shape index: {}]
  %s2 = inlined_call_operand.hbm [shape: f32[2,8,128], index: 2, kind: input, shape index: {}]
  %s3 = inlined_call_operand.hbm [shape: f32[2,8,128], index: 3, kind: output, shape index: {}]
  %s4 = sld [smem:[#allocation0]]
  $region65: #{tpu_custom_call.1} parent=0
    _
  %s6 = ssub.s32 1, %s4
  %s7 = scalar_select 0, %s6, %s4
  $region1: #{tpu_custom_call.1} parent=0
    #allocation5 [shape = 'u8[8192]{0}', space=vmem, size = 0x2000, scoped, tag = 'input window, operand 0']
    #allocation6 [shape = 's32[2]{0}', space=sflag, size = 0x8, scoped, tag = 'scoped memory for tpu_custom_call.1']
    #allocation7 [shape = 's32[2]{0}', space=sflag, size = 0x8, scoped, tag = 'scoped memory for tpu_custom_call.1']
    #allocation8 [shape = 'u8[8192]{0}', space=vmem, size = 0x2000, scoped, tag = 'input window, operand 1']
    #allocation9 [shape = 's32[2]{0}', space=sflag, size = 0x8, scoped, tag = 'scoped memory for tpu_custom_call.1']
    #allocation10 [shape = 'u8[8192]{0}', space=vmem, size = 0x2000, scoped, tag = 'input window, operand 2']
    #allocation11 [shape = 'u8[8192]{0}', space=vmem, size = 0x2000, scoped, tag = 'output window, operand 0']
    %8 = vsyncpa [#allocation6], 0
    %s9 = scalar_lea.sflag [#allocation6], 1
    %10 = vsyncpa %s9, 0
    %11 = vsyncpa [#allocation9], 0
    %s12 = scalar_lea.sflag [#allocation9], 1
    %13 = vsyncpa %s12, 0
    %14 = vsyncpa [#allocation7], 0
    %s15 = scalar_lea.sflag [#allocation7], 1
    %16 = vsyncpa %s15, 0
    loop: start=0, step=1, limit=4
    $region2: #{tpu_custom_call.1} parent=1 // loop_pre_header
      _
    $region3: #{tpu_custom_call.1} parent=1 // loop_header
      %s18 = sphi 0, %s22
      %p19 = scmp.ge.s32.totalorder %s18, 4
      %s25 = sphi 0, %s44
      %s26 = sphi 0, %s40
      %s27 = sphi 0, %s36
      %s28 = sphi 0, %s25
      %s29 = sphi 0, %s26
      %s30 = sphi 0, %s27
      %s31 = sphi 0, %s28
      %s32 = sphi 0, %s29
      %s33 = sphi 0, %s30
      %s49 = sphi 0, %s51
      %s52 = sphi 0, %s49
      %s53 = sphi 0, %s52
      %s69 = sphi 0, %s53
      %s77 = sphi 0, %s79
      %s80 = sphi 0, %s77
      %s81 = sphi 0, %s80
      %s97 = sphi 0, %s81
      %s105 = sphi 0, %s107
      %s108 = sphi 0, %s105
      %s109 = sphi 0, %s108
      %s125 = sphi 0, %s109
      %s133 = sphi 0, %s135
      %s136 = sphi 0, %s133
      %s137 = sphi 0, %s136
      %s153 = sphi 0, %s137
    $region4: #{tpu_custom_call.1} parent=1 // loop_header_branch
      %21 = sbr.rel (%p19) target = $region8
    $region5: #{tpu_custom_call.1} parent=1 // loop_body
      %s23 = ssub.s32 %s18, 1
      %s24 = ssub.s32 %s18, 2
      %s34 = sadd.s32 1, %s27
      %p35 = scmp.ge.s32.totalorder %s34, 1
      %s36 = scalar_select %p35, 0, %s34
      %s37 = sadd.s32 1, %s26
      %s38 = scalar_select %p35, %s37, %s26
      %p39 = scmp.ge.s32.totalorder %s38, 1
      %s40 = scalar_select %p39, 0, %s38
      %s41 = sadd.s32 1, %s25
      %s42 = scalar_select %p39, %s41, %s25
      %p43 = scmp.ge.s32.totalorder %s42, 2
      %s44 = scalar_select %p43, 0, %s42
      %s45 = ssub.s32 %s25, %s44
      %s46 = ssub.s32 %s26, %s40
      %s47 = sor.u32 %s45, %s46
      %p48 = scmp.eq.s32.totalorder %s47, 0
      %s50 = sadd.s32 %s49, 1
      %s51 = scalar_select %p48, %s49, %s50
      %p54 = pneg %p48
      %p55 = scmp.eq.s32.totalorder %s18, 1
      %p56 = por %p54, %p55
      %p57 = scmp.ne.s32.totalorder %s49, %s52
      %p58 = scmp.eq.s32.totalorder %s18, 0
      %p59 = por %p57, %p58
      %p60 = scmp.ne.s32.totalorder %s49, %s52
      %p61 = scmp.eq.s32.totalorder %s23, 1
      %p62 = por %p60, %p61
      %p63 = scmp.ne.s32.totalorder %s52, %s53
      %p64 = scmp.eq.s32.totalorder %s23, 0
      %p65 = por %p63, %p64
      %p66 = scmp.ne.s32.totalorder %s52, %s53
      %p67 = scmp.eq.s32.totalorder %s24, 1
      %p68 = por %p66, %p67
      %p70 = scmp.ne.s32.totalorder %s53, %s69
      %p71 = scmp.eq.s32.totalorder %s24, 0
      %p72 = por %p70, %p71
      %s73 = ssub.s32 %s25, %s44
      %s74 = ssub.s32 %s27, %s36
      %s75 = sor.u32 %s73, %s74
      %p76 = scmp.eq.s32.totalorder %s75, 0
      %s78 = sadd.s32 %s77, 1
      %s79 = scalar_select %p76, %s77, %s78
      %p82 = pneg %p76
      %p83 = scmp.eq.s32.totalorder %s18, 1
      %p84 = por %p82, %p83
      %p85 = scmp.ne.s32.totalorder %s77, %s80
      %p86 = scmp.eq.s32.totalorder %s18, 0
      %p87 = por %p85, %p86
      %p88 = scmp.ne.s32.totalorder %s77, %s80
      %p89 = scmp.eq.s32.totalorder %s23, 1
      %p90 = por %p88, %p89
      %p91 = scmp.ne.s32.totalorder %s80, %s81
      %p92 = scmp.eq.s32.totalorder %s23, 0
      %p93 = por %p91, %p92
      %p94 = scmp.ne.s32.totalorder %s80, %s81
      %p95 = scmp.eq.s32.totalorder %s24, 1
      %p96 = por %p94, %p95
      %p98 = scmp.ne.s32.totalorder %s81, %s97
      %p99 = scmp.eq.s32.totalorder %s24, 0
      %p100 = por %p98, %p99
      %s101 = ssub.s32 %s25, %s44
      %s102 = ssub.s32 %s27, %s36
      %s103 = sor.u32 %s101, %s102
      %p104 = scmp.eq.s32.totalorder %s103, 0
      %s106 = sadd.s32 %s105, 1
      %s107 = scalar_select %p104, %s105, %s106
      %p110 = pneg %p104
      %p111 = scmp.eq.s32.totalorder %s18, 1
      %p112 = por %p110, %p111
      %p113 = scmp.ne.s32.totalorder %s105, %s108
      %p114 = scmp.eq.s32.totalorder %s18, 0
      %p115 = por %p113, %p114
      %p116 = scmp.ne.s32.totalorder %s105, %s108
      %p117 = scmp.eq.s32.totalorder %s23, 1
      %p118 = por %p116, %p117
      %p119 = scmp.ne.s32.totalorder %s108, %s109
      %p120 = scmp.eq.s32.totalorder %s23, 0
      %p121 = por %p119, %p120
      %p122 = scmp.ne.s32.totalorder %s108, %s109
      %p123 = scmp.eq.s32.totalorder %s24, 1
      %p124 = por %p122, %p123
      %p126 = scmp.ne.s32.totalorder %s109, %s125
      %p127 = scmp.eq.s32.totalorder %s24, 0
      %p128 = por %p126, %p127
      %s129 = ssub.s32 %s25, %s44
      %s130 = ssub.s32 %s26, %s40
      %s131 = sor.u32 %s129, %s130
      %p132 = scmp.eq.s32.totalorder %s131, 0
      %s134 = sadd.s32 %s133, 1
      %s135 = scalar_select %p132, %s133, %s134
      %p138 = pneg %p132
      %p139 = scmp.eq.s32.totalorder %s18, 1
      %p140 = por %p138, %p139
      %p141 = scmp.ne.s32.totalorder %s133, %s136
      %p142 = scmp.eq.s32.totalorder %s18, 0
      %p143 = por %p141, %p142
      %p144 = scmp.ne.s32.totalorder %s133, %s136
      %p145 = scmp.eq.s32.totalorder %s23, 1
      %p146 = por %p144, %p145
      %p147 = scmp.ne.s32.totalorder %s136, %s137
      %p148 = scmp.eq.s32.totalorder %s23, 0
      %p149 = por %p147, %p148
      %p150 = scmp.ne.s32.totalorder %s136, %s137
      %p151 = scmp.eq.s32.totalorder %s24, 1
      %p152 = por %p150, %p151
      %p154 = scmp.ne.s32.totalorder %s137, %s153
      %p155 = scmp.eq.s32.totalorder %s24, 0
      %p156 = por %p154, %p155
      %p157 = scmp.le.s32.totalorder 1, %s18
      %p158 = scmp.lt.s32.totalorder %s18, 3
      %p159 = pnand %p157, %p158
      %p160 = pneg %p159
      // Predicated region
      $region9: #{tpu_custom_call.1} parent=5 // pred_check
        _
      $region10: #{tpu_custom_call.1} parent=5 // pred_check_branch
        %162 = sbr.rel (%p159) target = $region12
      $region11: #{tpu_custom_call.1} parent=5 // pred_region
        %s163 = ssub.s32 %s18, 1
      $region12: #{tpu_custom_call.1} parent=5 // pred_fallthru
        _
      %p164 = scmp.lt.s32.totalorder %s18, 2
      // Predicated region
      $region13: #{tpu_custom_call.1} parent=5 // pred_check
        %p165 = pneg %p164
      $region14: #{tpu_custom_call.1} parent=5 // pred_check_branch
        %167 = sbr.rel (%p165) target = $region16
      $region15: #{tpu_custom_call.1} parent=5 // pred_region
        // Predicated region
        $region17: #{tpu_custom_call.1} parent=15 // pred_check
          %p168 = pneg %p59
        $region18: #{tpu_custom_call.1} parent=15 // pred_check_branch
          %170 = sbr.rel (%p168) target = $region20
        $region19: #{tpu_custom_call.1} parent=15 // pred_region
          %s171 = sand.u32 %s49, 1
          %s172 = scalar_lea.sflag [#allocation6], %s171
          %s173 = sand.u32 %s49, 1
          %s174 = smul.addr %s173, 8
          %s175 = scalar_lea.vmem [#allocation5], %s174
          %s177 = ssub.s32 128, 128
          %178 = vsyncadd %s172, %s177
          %s179 = sadd.s32 %s26, %s25
          %s180 = smul.addr %s179, 128
          %s181 = scalar_lea.hbm %s0, %s180
          %s183 = sshll.u32 %s175, 4
          %s184 = int_to_ptr.vmem [resolvable:$true] %s183
          %186 = dma.hbm_to_vmem [thread:$0]  %s181, 128, %s184, %s172
        $region20: #{tpu_custom_call.1} parent=15 // pred_fallthru
          _
        // Predicated region
        $region21: #{tpu_custom_call.1} parent=15 // pred_check
          %p187 = pneg %p87
        $region22: #{tpu_custom_call.1} parent=15 // pred_check_branch
          %189 = sbr.rel (%p187) target = $region24
        $region23: #{tpu_custom_call.1} parent=15 // pred_region
          %s190 = sand.u32 %s18, 1
          %s191 = scalar_lea.sflag [#allocation9], %s190
          %s192 = sand.u32 %s77, 1
          %s193 = smul.addr %s192, 8
          %s194 = scalar_lea.vmem [#allocation8], %s193
          %s196 = ssub.s32 128, 128
          %197 = vsyncadd %s191, %s196
          %s198 = sadd.s32 %s27, %s25
          %s199 = smul.addr %s198, 128
          %s200 = scalar_lea.hbm %s1, %s199
          %s202 = sshll.u32 %s194, 4
          %s203 = int_to_ptr.vmem [resolvable:$true] %s202
          %205 = dma.hbm_to_vmem [thread:$0]  %s200, 128, %s203, %s191
        $region24: #{tpu_custom_call.1} parent=15 // pred_fallthru
          _
        // Predicated region
        $region25: #{tpu_custom_call.1} parent=15 // pred_check
          %p206 = pneg %p115
        $region26: #{tpu_custom_call.1} parent=15 // pred_check_branch
          %208 = sbr.rel (%p206) target = $region28
        $region27: #{tpu_custom_call.1} parent=15 // pred_region
          %s209 = sand.u32 %s18, 1
          %s210 = scalar_lea.sflag [#allocation9], %s209
          %s211 = sand.u32 %s105, 1
          %s212 = smul.addr %s211, 8
          %s213 = scalar_lea.vmem [#allocation10], %s212
          %s215 = ssub.s32 128, 128
          %216 = vsyncadd %s210, %s215
          %s217 = sadd.s32 %s27, %s25
          %s218 = smul.addr %s217, 128
          %s219 = scalar_lea.hbm %s2, %s218
          %s221 = sshll.u32 %s213, 4
          %s222 = int_to_ptr.vmem [resolvable:$true] %s221
          %224 = dma.hbm_to_vmem [thread:$0]  %s219, 128, %s222, %s210
        $region28: #{tpu_custom_call.1} parent=15 // pred_fallthru
          _
      $region16: #{tpu_custom_call.1} parent=5 // pred_fallthru
        _
      %p225 = scmp.le.s32.totalorder 1, %s18
      %p226 = scmp.lt.s32.totalorder %s18, 3
      %p227 = pnand %p225, %p226
      %p228 = pneg %p227
      // Predicated region
      $region29: #{tpu_custom_call.1} parent=5 // pred_check
        _
      $region30: #{tpu_custom_call.1} parent=5 // pred_check_branch
        %230 = sbr.rel (%p227) target = $region32
      $region31: #{tpu_custom_call.1} parent=5 // pred_region
        %s231 = ssub.s32 %s18, 1
        %s232 = sand.u32 %s52, 1
        %s233 = scalar_lea.sflag [#allocation6], %s232
        %s234 = sand.u32 %s52, 1
        %s235 = smul.addr %s234, 8
        %s236 = scalar_lea.vmem [#allocation5], %s235
        // Predicated region
        $region33: #{tpu_custom_call.1} parent=31 // pred_check
          %p237 = pneg %p65
        $region34: #{tpu_custom_call.1} parent=31 // pred_check_branch
          %239 = sbr.rel (%p237) target = $region36
        $region35: #{tpu_custom_call.1} parent=31 // pred_region
          %240 = dma.done %s233, 128
        $region36: #{tpu_custom_call.1} parent=31 // pred_fallthru
          _
        %s241 = sand.u32 %s23, 1
        %s242 = scalar_lea.sflag [#allocation9], %s241
        %s243 = sand.u32 %s80, 1
        %s244 = smul.addr %s243, 8
        %s245 = scalar_lea.vmem [#allocation8], %s244
        // Predicated region
        $region37: #{tpu_custom_call.1} parent=31 // pred_check
          %p246 = pneg %p93
        $region38: #{tpu_custom_call.1} parent=31 // pred_check_branch
          %248 = sbr.rel (%p246) target = $region40
        $region39: #{tpu_custom_call.1} parent=31 // pred_region
          %249 = dma.done %s242, 128
        $region40: #{tpu_custom_call.1} parent=31 // pred_fallthru
          _
        %s250 = sand.u32 %s23, 1
        %s251 = scalar_lea.sflag [#allocation9], %s250
        %s252 = sand.u32 %s108, 1
        %s253 = smul.addr %s252, 8
        %s254 = scalar_lea.vmem [#allocation10], %s253
        // Predicated region
        $region41: #{tpu_custom_call.1} parent=31 // pred_check
          %p255 = pneg %p121
        $region42: #{tpu_custom_call.1} parent=31 // pred_check_branch
          %257 = sbr.rel (%p255) target = $region44
        $region43: #{tpu_custom_call.1} parent=31 // pred_region
          %258 = dma.done %s251, 128
        $region44: #{tpu_custom_call.1} parent=31 // pred_fallthru
          _
        %s259 = sand.u32 %s52, 1
        %s260 = scalar_lea.sflag [#allocation6], %s259
        %s261 = sand.u32 %s52, 1
        %s262 = smul.addr %s261, 8
        %s263 = scalar_lea.vmem [#allocation5], %s262
        %p264 = pneg %p65
        %p265 = pneg %p62
        %s266 = sand.u32 %s23, 1
        %s267 = scalar_lea.sflag [#allocation9], %s266
        %s268 = sand.u32 %s80, 1
        %s269 = smul.addr %s268, 8
        %s270 = scalar_lea.vmem [#allocation8], %s269
        %p271 = pneg %p93
        %p272 = pneg %p90
        %s273 = sand.u32 %s23, 1
        %s274 = scalar_lea.sflag [#allocation9], %s273
        %s275 = sand.u32 %s108, 1
        %s276 = smul.addr %s275, 8
        %s277 = scalar_lea.vmem [#allocation10], %s276
        %p278 = pneg %p121
        %p279 = pneg %p118
        %p280 = pneg %p149
        %p281 = pneg %p146
        %s282 = sand.u32 %s136, 1
        %s283 = scalar_lea.sflag [#allocation7], %s282
        %s284 = sand.u32 %s136, 1
        %s285 = smul.addr %s284, 8
        %s286 = scalar_lea.vmem [#allocation11], %s285
        %p287 = scmp.eq.s32.totalorder %s30, 0
        // Predicated region
        $region45: #{tpu_custom_call.1} parent=31 // pred_check
          %p288 = pneg %p287
        $region46: #{tpu_custom_call.1} parent=31 // pred_check_branch
          %290 = sbr.rel (%p288) target = $region48
        $region47: #{tpu_custom_call.1} parent=31 // pred_region
          %vm291 = vcmask 7168
          %292 = vst.msk [vmem:[#allocation3] sm:$0xff] %vm291, -inf
          %293 = vst.msk [vmem:[#allocation3 + $0x8] sm:$0xff] %vm291, -inf
          %294 = vst.msk [vmem:[#allocation3 + $0x10] sm:$0xff] %vm291, -inf
          %295 = vst.msk [vmem:[#allocation3 + $0x18] sm:$0xff] %vm291, -inf
          %296 = vst.msk [vmem:[#allocation4] sm:$0xff] %vm291, 0.0
          %297 = vst.msk [vmem:[#allocation4 + $0x8] sm:$0xff] %vm291, 0.0
          %298 = vst.msk [vmem:[#allocation4 + $0x10] sm:$0xff] %vm291, 0.0
          %299 = vst.msk [vmem:[#allocation4 + $0x18] sm:$0xff] %vm291, 0.0
          %vm300 = vcmask 261120
          %301 = vst.msk [vmem:[#allocation2] sm:$0xff] %vm300, 0.0
          %302 = vst.msk [vmem:[#allocation2 + $0x8] sm:$0xff] %vm300, 0.0
          %303 = vst.msk [vmem:[#allocation2 + $0x10] sm:$0xff] %vm300, 0.0
          %304 = vst.msk [vmem:[#allocation2 + $0x18] sm:$0xff] %vm300, 0.0
        $region48: #{tpu_custom_call.1} parent=31 // pred_fallthru
          _
        %v305 = vld [vmem:[%s236] sm:$0xff]
        %v306 = vmul.f32 %v305, 0.17677669
        %v307 = vld [vmem:[%s245] sm:$0xff]
        %v308 = vld [vmem:[%s254] sm:$0xff]
        %vm309 = vcmask 261120
        %v311 = vsel %vm309, %v306, 0
        %v314 = vsel %vm309, %v307, 0
        %316 = vmatprep.subr.mxu0 0.0
        %317 = vmatpush1.xpose.msra.mxu0 %v314
        %318 = vmatprep.subr.mxu0 0.0
        %319 = vmatpush1.xpose.msra.mxu0 0.0
        %320 = vmatprep.subr.mxu0 0.0
        %321 = vmatpush1.xpose.msra.mxu0 0.0
        %322 = vmatprep.subr.mxu0 0.0
        %323 = vmatpush1.xpose.msra.mxu0 0.0
        %324 = vmatprep.subr.mxu0 0.0
        %325 = vmatpush1.xpose.msra.mxu0 0.0
        %326 = vmatprep.subr.mxu0 0.0
        %327 = vmatpush1.xpose.msra.mxu0 0.0
        %328 = vmatprep.subr.mxu0 0.0
        %329 = vmatpush1.xpose.msra.mxu0 0.0
        %330 = vmatprep.subr.mxu0 0.0
        %331 = vmatpush1.xpose.msra.mxu0 0.0
        %332 = vmatprep.subr.mxu0 0.0
        %333 = vmatpush1.xpose.msra.mxu0 0.0
        %334 = vmatprep.subr.mxu0 0.0
        %335 = vmatpush1.xpose.msra.mxu0 0.0
        %336 = vmatprep.subr.mxu0 0.0
        %337 = vmatpush1.xpose.msra.mxu0 0.0
        %338 = vmatprep.subr.mxu0 0.0
        %339 = vmatpush1.xpose.msra.mxu0 0.0
        %340 = vmatprep.subr.mxu0 0.0
        %341 = vmatpush1.xpose.msra.mxu0 0.0
        %342 = vmatprep.subr.mxu0 0.0
        %343 = vmatpush1.xpose.msra.mxu0 0.0
        %344 = vmatprep.subr.mxu0 0.0
        %345 = vmatpush1.xpose.msra.mxu0 0.0
        %346 = vmatprep.subr.mxu0 0.0
        %347 = vmatpush1.xpose.msra.mxu0 0.0
        %348 = vmatprep.subr.mxu0 0.0
        %349 = vmatpush1.xpose.msra.mxu0 0.0
        %350 = vmatprep.subr.mxu0 0.0
        %351 = vmatpush1.xpose.msra.mxu0 0.0
        %352 = vmatprep.subr.mxu0 0.0
        %353 = vmatpush1.xpose.msra.mxu0 0.0
        %354 = vmatprep.subr.mxu0 0.0
        %355 = vmatpush1.xpose.msra.mxu0 0.0
        %356 = vmatprep.subr.mxu0 0.0
        %357 = vmatpush1.xpose.msra.mxu0 0.0
        %358 = vmatprep.subr.mxu0 0.0
        %359 = vmatpush1.xpose.msra.mxu0 0.0
        %360 = vmatprep.subr.mxu0 0.0
        %361 = vmatpush1.xpose.msra.mxu0 0.0
        %362 = vmatprep.subr.mxu0 0.0
        %363 = vmatpush1.xpose.msra.mxu0 0.0
        %364 = vmatprep.subr.mxu0 0.0
        %365 = vmatpush1.xpose.msra.mxu0 0.0
        %366 = vmatprep.subr.mxu0 0.0
        %367 = vmatpush1.xpose.msra.mxu0 0.0
        %368 = vmatprep.subr.mxu0 0.0
        %369 = vmatpush1.xpose.msra.mxu0 0.0
        %370 = vmatprep.subr.mxu0 0.0
        %371 = vmatpush1.xpose.msra.mxu0 0.0
        %372 = vmatprep.subr.mxu0 0.0
        %373 = vmatpush1.xpose.msra.mxu0 0.0
        %374 = vmatprep.subr.mxu0 0.0
        %375 = vmatpush1.xpose.msra.mxu0 0.0
        %376 = vmatprep.subr.mxu0 0.0
        %377 = vmatpush1.xpose.msra.mxu0 0.0
        %378 = vmatprep.subr.mxu0 0.0
        %379 = vmatpush1.xpose.msra.mxu0 0.0
        %380 = vmatprep.mubr.f32.mxu0 0.0
        %381 = vmatmul.mubr.f32.gmra.mrb[0].mxu0 %v311
        %v382 = vpop.f32.mrb[0].mxu0
        %v383 = vadd.f32 0.0, %v382
        %v384 = vpop.f32.mrb[0].mxu0
        %385 = vdwg.mxu0
        %v386 = vld [vmem:[#allocation3] sm:$0xff]
        %vm387 = vcmask 64512
        %v388 = vsel %vm387, %v383, -inf
        %389 = vmax.xlane.f32.xlu0 %v388
        %v390 = vpop.xlane.xlu0 %389
        %v391 = vmax.f32 %v386, %v390
        %v392 = vsub.f32 %v386, %v391
        %v393 = vmul.f32 %v392, 1.442695
        %v394 = vpow.pop %v393
        %396 = vset.pattern.permute.xlu0 0
        %397 = vperm.xlu0 %396, %v391
        %v398 = vpop.permute.xlu0 %397
        %v400 = vsub.f32 %v383, %v398
        %v401 = vmul.f32 %v400, 1.442695
        %v402 = vpow.pop %v401
        %v403 = vld [vmem:[#allocation4] sm:$0xff]
        %v404 = vmul.f32 %v394, %v403
        %v405 = vsel %vm387, %v402, 0.0
        %406 = vadd.xlane.f32.xlu0 %v405
        %v407 = vpop.xlane.xlu0 %406
        %v408 = vadd.f32 %v404, %v407
        %vm409 = vcmask 7168
        %410 = vst.msk [vmem:[#allocation4] sm:$0xff] %vm409, %v408
        %v411 = vld [vmem:[#allocation2] sm:$0xff]
        %413 = vset.pattern.permute.xlu0 0
        %414 = vperm.xlu0 %413, %v394
        %v415 = vpop.permute.xlu0 %414
        %v417 = vmul.f32 %v415, %v411
        %v419 = vsel %vm387, %v402, 0
        %421 = vmatprep.subr.mxu0 0.0
        %422 = vmatpush1.msra.mxu0 %v308
        %423 = vmatprep.subr.mxu0 0.0
        %424 = vmatpush1.msra.mxu0 0.0
        %425 = vmatprep.subr.mxu0 0.0
        %426 = vmatpush1.msra.mxu0 0.0
        %427 = vmatprep.subr.mxu0 0.0
        %428 = vmatpush1.msra.mxu0 0.0
        %429 = vmatprep.subr.mxu0 0.0
        %430 = vmatpush1.msra.mxu0 0.0
        %431 = vmatprep.subr.mxu0 0.0
        %432 = vmatpush1.msra.mxu0 0.0
        %433 = vmatprep.subr.mxu0 0.0
        %434 = vmatpush1.msra.mxu0 0.0
        %435 = vmatprep.subr.mxu0 0.0
        %436 = vmatpush1.msra.mxu0 0.0
        %437 = vmatprep.subr.mxu0 0.0
        %438 = vmatpush1.msra.mxu0 0.0
        %439 = vmatprep.subr.mxu0 0.0
        %440 = vmatpush1.msra.mxu0 0.0
        %441 = vmatprep.subr.mxu0 0.0
        %442 = vmatpush1.msra.mxu0 0.0
        %443 = vmatprep.subr.mxu0 0.0
        %444 = vmatpush1.msra.mxu0 0.0
        %445 = vmatprep.subr.mxu0 0.0
        %446 = vmatpush1.msra.mxu0 0.0
        %447 = vmatprep.subr.mxu0 0.0
        %448 = vmatpush1.msra.mxu0 0.0
        %449 = vmatprep.subr.mxu0 0.0
        %450 = vmatpush1.msra.mxu0 0.0
        %451 = vmatprep.subr.mxu0 0.0
        %452 = vmatpush1.msra.mxu0 0.0
        %453 = vmatprep.subr.mxu0 0.0
        %454 = vmatpush1.msra.mxu0 0.0
        %455 = vmatprep.subr.mxu0 0.0
        %456 = vmatpush1.msra.mxu0 0.0
        %457 = vmatprep.subr.mxu0 0.0
        %458 = vmatpush1.msra.mxu0 0.0
        %459 = vmatprep.subr.mxu0 0.0
        %460 = vmatpush1.msra.mxu0 0.0
        %461 = vmatprep.subr.mxu0 0.0
        %462 = vmatpush1.msra.mxu0 0.0
        %463 = vmatprep.subr.mxu0 0.0
        %464 = vmatpush1.msra.mxu0 0.0
        %465 = vmatprep.subr.mxu0 0.0
        %466 = vmatpush1.msra.mxu0 0.0
        %467 = vmatprep.subr.mxu0 0.0
        %468 = vmatpush1.msra.mxu0 0.0
        %469 = vmatprep.subr.mxu0 0.0
        %470 = vmatpush1.msra.mxu0 0.0
        %471 = vmatprep.subr.mxu0 0.0
        %472 = vmatpush1.msra.mxu0 0.0
        %473 = vmatprep.subr.mxu0 0.0
        %474 = vmatpush1.msra.mxu0 0.0
        %475 = vmatprep.subr.mxu0 0.0
        %476 = vmatpush1.msra.mxu0 0.0
        %477 = vmatprep.subr.mxu0 0.0
        %478 = vmatpush1.msra.mxu0 0.0
        %479 = vmatprep.subr.mxu0 0.0
        %480 = vmatpush1.msra.mxu0 0.0
        %481 = vmatprep.subr.mxu0 0.0
        %482 = vmatpush1.msra.mxu0 0.0
        %483 = vmatprep.subr.mxu0 0.0
        %484 = vmatpush1.msra.mxu0 0.0
        %485 = vmatprep.mubr.f32.mxu0 0.0
        %486 = vmatmul.mubr.f32.gmra.mrb[0].mxu0 %v419
        %v487 = vpop.f32.mrb[0].mxu0
        %v488 = vadd.f32 0.0, %v487
        %v489 = vpop.f32.mrb[0].mxu0
        %490 = vdwg.mxu0
        %v491 = vadd.f32 %v417, %v488
        %492 = vst.msk [vmem:[#allocation2] sm:$0xff] %vm309, %v491
        %493 = vst.msk [vmem:[#allocation3] sm:$0xff] %vm409, %v391
        %494 = vrot.lane.b32.xlu0 %v306, 96
        %v495 = vpop.permute.xlu0 %494
        %496 = vrot.lane.b32.xlu0 %v307, 96
        %v497 = vpop.permute.xlu0 %496
        %v498 = vsel %vm309, %v495, 0
        %v500 = vsel %vm309, %v497, 0
        %502 = vmatprep.subr.mxu0 0.0
        %503 = vmatpush1.xpose.msra.mxu0 %v500
        %504 = vmatprep.subr.mxu0 0.0
        %505 = vmatpush1.xpose.msra.mxu0 0.0
        %506 = vmatprep.subr.mxu0 0.0
        %507 = vmatpush1.xpose.msra.mxu0 0.0
        %508 = vmatprep.subr.mxu0 0.0
        %509 = vmatpush1.xpose.msra.mxu0 0.0
        %510 = vmatprep.subr.mxu0 0.0
        %511 = vmatpush1.xpose.msra.mxu0 0.0
        %512 = vmatprep.subr.mxu0 0.0
        %513 = vmatpush1.xpose.msra.mxu0 0.0
        %514 = vmatprep.subr.mxu0 0.0
        %515 = vmatpush1.xpose.msra.mxu0 0.0
        %516 = vmatprep.subr.mxu0 0.0
        %517 = vmatpush1.xpose.msra.mxu0 0.0
        %518 = vmatprep.subr.mxu0 0.0
        %519 = vmatpush1.xpose.msra.mxu0 0.0
        %520 = vmatprep.subr.mxu0 0.0
        %521 = vmatpush1.xpose.msra.mxu0 0.0
        %522 = vmatprep.subr.mxu0 0.0
        %523 = vmatpush1.xpose.msra.mxu0 0.0
        %524 = vmatprep.subr.mxu0 0.0
        %525 = vmatpush1.xpose.msra.mxu0 0.0
        %526 = vmatprep.subr.mxu0 0.0
        %527 = vmatpush1.xpose.msra.mxu0 0.0
        %528 = vmatprep.subr.mxu0 0.0
        %529 = vmatpush1.xpose.msra.mxu0 0.0
        %530 = vmatprep.subr.mxu0 0.0
        %531 = vmatpush1.xpose.msra.mxu0 0.0
        %532 = vmatprep.subr.mxu0 0.0
        %533 = vmatpush1.xpose.msra.mxu0 0.0
        %534 = vmatprep.subr.mxu0 0.0
        %535 = vmatpush1.xpose.msra.mxu0 0.0
        %536 = vmatprep.subr.mxu0 0.0
        %537 = vmatpush1.xpose.msra.mxu0 0.0
        %538 = vmatprep.subr.mxu0 0.0
        %539 = vmatpush1.xpose.msra.mxu0 0.0
        %540 = vmatprep.subr.mxu0 0.0
        %541 = vmatpush1.xpose.msra.mxu0 0.0
        %542 = vmatprep.subr.mxu0 0.0
        %543 = vmatpush1.xpose.msra.mxu0 0.0
        %544 = vmatprep.subr.mxu0 0.0
        %545 = vmatpush1.xpose.msra.mxu0 0.0
        %546 = vmatprep.subr.mxu0 0.0
        %547 = vmatpush1.xpose.msra.mxu0 0.0
        %548 = vmatprep.subr.mxu0 0.0
        %549 = vmatpush1.xpose.msra.mxu0 0.0
        %550 = vmatprep.subr.mxu0 0.0
        %551 = vmatpush1.xpose.msra.mxu0 0.0
        %552 = vmatprep.subr.mxu0 0.0
        %553 = vmatpush1.xpose.msra.mxu0 0.0
        %554 = vmatprep.subr.mxu0 0.0
        %555 = vmatpush1.xpose.msra.mxu0 0.0
        %556 = vmatprep.subr.mxu0 0.0
        %557 = vmatpush1.xpose.msra.mxu0 0.0
        %558 = vmatprep.subr.mxu0 0.0
        %559 = vmatpush1.xpose.msra.mxu0 0.0
        %560 = vmatprep.subr.mxu0 0.0
        %561 = vmatpush1.xpose.msra.mxu0 0.0
        %562 = vmatprep.subr.mxu0 0.0
        %563 = vmatpush1.xpose.msra.mxu0 0.0
        %564 = vmatprep.subr.mxu0 0.0
        %565 = vmatpush1.xpose.msra.mxu0 0.0
        %566 = vmatprep.mubr.f32.mxu0 0.0
        %567 = vmatmul.mubr.f32.gmra.mrb[0].mxu0 %v498
        %v568 = vpop.f32.mrb[0].mxu0
        %v569 = vadd.f32 0.0, %v568
        %v570 = vpop.f32.mrb[0].mxu0
        %571 = vdwg.mxu0
        %s572 = scalar_lea.vmem [#allocation3], 8
        %v573 = vld [vmem:[%s572] sm:$0xff]
        %v574 = vsel %vm387, %v569, -inf
        %575 = vmax.xlane.f32.xlu0 %v574
        %v576 = vpop.xlane.xlu0 %575
        %v577 = vmax.f32 %v573, %v576
        %v578 = vsub.f32 %v573, %v577
        %v579 = vmul.f32 %v578, 1.442695
        %v580 = vpow.pop %v579
        %582 = vset.pattern.permute.xlu0 0
        %583 = vperm.xlu0 %582, %v577
        %v584 = vpop.permute.xlu0 %583
        %v586 = vsub.f32 %v569, %v584
        %v587 = vmul.f32 %v586, 1.442695
        %v588 = vpow.pop %v587
        %s589 = scalar_lea.vmem [#allocation4], 8
        %v590 = vld [vmem:[%s589] sm:$0xff]
        %v591 = vmul.f32 %v580, %v590
        %v592 = vsel %vm387, %v588, 0.0
        %593 = vadd.xlane.f32.xlu0 %v592
        %v594 = vpop.xlane.xlu0 %593
        %v595 = vadd.f32 %v591, %v594
        %596 = vst.msk [vmem:[%s589] sm:$0xff] %vm409, %v595
        %s597 = scalar_lea.vmem [#allocation2], 8
        %v598 = vld [vmem:[%s597] sm:$0xff]
        %600 = vset.pattern.permute.xlu0 0
        %601 = vperm.xlu0 %600, %v580
        %v602 = vpop.permute.xlu0 %601
        %v604 = vmul.f32 %v602, %v598
        %606 = vrot.lane.b32.xlu0 %v308, 96
        %v607 = vpop.permute.xlu0 %606
        %v610 = vsel %vm387, %v588, 0
        %612 = vmatprep.subr.mxu0 0.0
        %613 = vmatpush1.msra.mxu0 %v607
        %614 = vmatprep.subr.mxu0 0.0
        %615 = vmatpush1.msra.mxu0 0.0
        %616 = vmatprep.subr.mxu0 0.0
        %617 = vmatpush1.msra.mxu0 0.0
        %618 = vmatprep.subr.mxu0 0.0
        %619 = vmatpush1.msra.mxu0 0.0
        %620 = vmatprep.subr.mxu0 0.0
        %621 = vmatpush1.msra.mxu0 0.0
        %622 = vmatprep.subr.mxu0 0.0
        %623 = vmatpush1.msra.mxu0 0.0
        %624 = vmatprep.subr.mxu0 0.0
        %625 = vmatpush1.msra.mxu0 0.0
        %626 = vmatprep.subr.mxu0 0.0
        %627 = vmatpush1.msra.mxu0 0.0
        %628 = vmatprep.subr.mxu0 0.0
        %629 = vmatpush1.msra.mxu0 0.0
        %630 = vmatprep.subr.mxu0 0.0
        %631 = vmatpush1.msra.mxu0 0.0
        %632 = vmatprep.subr.mxu0 0.0
        %633 = vmatpush1.msra.mxu0 0.0
        %634 = vmatprep.subr.mxu0 0.0
        %635 = vmatpush1.msra.mxu0 0.0
        %636 = vmatprep.subr.mxu0 0.0
        %637 = vmatpush1.msra.mxu0 0.0
        %638 = vmatprep.subr.mxu0 0.0
        %639 = vmatpush1.msra.mxu0 0.0
        %640 = vmatprep.subr.mxu0 0.0
        %641 = vmatpush1.msra.mxu0 0.0
        %642 = vmatprep.subr.mxu0 0.0
        %643 = vmatpush1.msra.mxu0 0.0
        %644 = vmatprep.subr.mxu0 0.0
        %645 = vmatpush1.msra.mxu0 0.0
        %646 = vmatprep.subr.mxu0 0.0
        %647 = vmatpush1.msra.mxu0 0.0
        %648 = vmatprep.subr.mxu0 0.0
        %649 = vmatpush1.msra.mxu0 0.0
        %650 = vmatprep.subr.mxu0 0.0
        %651 = vmatpush1.msra.mxu0 0.0
        %652 = vmatprep.subr.mxu0 0.0
        %653 = vmatpush1.msra.mxu0 0.0
        %654 = vmatprep.subr.mxu0 0.0
        %655 = vmatpush1.msra.mxu0 0.0
        %656 = vmatprep.subr.mxu0 0.0
        %657 = vmatpush1.msra.mxu0 0.0
        %658 = vmatprep.subr.mxu0 0.0
        %659 = vmatpush1.msra.mxu0 0.0
        %660 = vmatprep.subr.mxu0 0.0
        %661 = vmatpush1.msra.mxu0 0.0
        %662 = vmatprep.subr.mxu0 0.0
        %663 = vmatpush1.msra.mxu0 0.0
        %664 = vmatprep.subr.mxu0 0.0
        %665 = vmatpush1.msra.mxu0 0.0
        %666 = vmatprep.subr.mxu0 0.0
        %667 = vmatpush1.msra.mxu0 0.0
        %668 = vmatprep.subr.mxu0 0.0
        %669 = vmatpush1.msra.mxu0 0.0
        %670 = vmatprep.subr.mxu0 0.0
        %671 = vmatpush1.msra.mxu0 0.0
        %672 = vmatprep.subr.mxu0 0.0
        %673 = vmatpush1.msra.mxu0 0.0
        %674 = vmatprep.subr.mxu0 0.0
        %675 = vmatpush1.msra.mxu0 0.0
        %676 = vmatprep.mubr.f32.mxu0 0.0
        %677 = vmatmul.mubr.f32.gmra.mrb[0].mxu0 %v610
        %v678 = vpop.f32.mrb[0].mxu0
        %v679 = vadd.f32 0.0, %v678
        %v680 = vpop.f32.mrb[0].mxu0
        %681 = vdwg.mxu0
        %v682 = vadd.f32 %v604, %v679
        %683 = vst.msk [vmem:[%s597] sm:$0xff] %vm309, %v682
        %684 = vst.msk [vmem:[%s572] sm:$0xff] %vm409, %v577
        %685 = vrot.lane.b32.xlu0 %v306, 64
        %v686 = vpop.permute.xlu0 %685
        %687 = vrot.lane.b32.xlu0 %v307, 64
        %v688 = vpop.permute.xlu0 %687
        %v689 = vsel %vm309, %v686, 0
        %v691 = vsel %vm309, %v688, 0
        %693 = vmatprep.subr.mxu0 0.0
        %694 = vmatpush1.xpose.msra.mxu0 %v691
        %695 = vmatprep.subr.mxu0 0.0
        %696 = vmatpush1.xpose.msra.mxu0 0.0
        %697 = vmatprep.subr.mxu0 0.0
        %698 = vmatpush1.xpose.msra.mxu0 0.0
        %699 = vmatprep.subr.mxu0 0.0
        %700 = vmatpush1.xpose.msra.mxu0 0.0
        %701 = vmatprep.subr.mxu0 0.0
        %702 = vmatpush1.xpose.msra.mxu0 0.0
        %703 = vmatprep.subr.mxu0 0.0
        %704 = vmatpush1.xpose.msra.mxu0 0.0
        %705 = vmatprep.subr.mxu0 0.0
        %706 = vmatpush1.xpose.msra.mxu0 0.0
        %707 = vmatprep.subr.mxu0 0.0
        %708 = vmatpush1.xpose.msra.mxu0 0.0
        %709 = vmatprep.subr.mxu0 0.0
        %710 = vmatpush1.xpose.msra.mxu0 0.0
        %711 = vmatprep.subr.mxu0 0.0
        %712 = vmatpush1.xpose.msra.mxu0 0.0
        %713 = vmatprep.subr.mxu0 0.0
        %714 = vmatpush1.xpose.msra.mxu0 0.0
        %715 = vmatprep.subr.mxu0 0.0
        %716 = vmatpush1.xpose.msra.mxu0 0.0
        %717 = vmatprep.subr.mxu0 0.0
        %718 = vmatpush1.xpose.msra.mxu0 0.0
        %719 = vmatprep.subr.mxu0 0.0
        %720 = vmatpush1.xpose.msra.mxu0 0.0
        %721 = vmatprep.subr.mxu0 0.0
        %722 = vmatpush1.xpose.msra.mxu0 0.0
        %723 = vmatprep.subr.mxu0 0.0
        %724 = vmatpush1.xpose.msra.mxu0 0.0
        %725 = vmatprep.subr.mxu0 0.0
        %726 = vmatpush1.xpose.msra.mxu0 0.0
        %727 = vmatprep.subr.mxu0 0.0
        %728 = vmatpush1.xpose.msra.mxu0 0.0
        %729 = vmatprep.subr.mxu0 0.0
        %730 = vmatpush1.xpose.msra.mxu0 0.0
        %731 = vmatprep.subr.mxu0 0.0
        %732 = vmatpush1.xpose.msra.mxu0 0.0
        %733 = vmatprep.subr.mxu0 0.0
        %734 = vmatpush1.xpose.msra.mxu0 0.0
        %735 = vmatprep.subr.mxu0 0.0
        %736 = vmatpush1.xpose.msra.mxu0 0.0
        %737 = vmatprep.subr.mxu0 0.0
        %738 = vmatpush1.xpose.msra.mxu0 0.0
        %739 = vmatprep.subr.mxu0 0.0
        %740 = vmatpush1.xpose.msra.mxu0 0.0
        %741 = vmatprep.subr.mxu0 0.0
        %742 = vmatpush1.xpose.msra.mxu0 0.0
        %743 = vmatprep.subr.mxu0 0.0
        %744 = vmatpush1.xpose.msra.mxu0 0.0
        %745 = vmatprep.subr.mxu0 0.0
        %746 = vmatpush1.xpose.msra.mxu0 0.0
        %747 = vmatprep.subr.mxu0 0.0
        %748 = vmatpush1.xpose.msra.mxu0 0.0
        %749 = vmatprep.subr.mxu0 0.0
        %750 = vmatpush1.xpose.msra.mxu0 0.0
        %751 = vmatprep.subr.mxu0 0.0
        %752 = vmatpush1.xpose.msra.mxu0 0.0
        %753 = vmatprep.subr.mxu0 0.0
        %754 = vmatpush1.xpose.msra.mxu0 0.0
        %755 = vmatprep.subr.mxu0 0.0
        %756 = vmatpush1.xpose.msra.mxu0 0.0
        %757 = vmatprep.mubr.f32.mxu0 0.0
        %758 = vmatmul.mubr.f32.gmra.mrb[0].mxu0 %v689
        %v759 = vpop.f32.mrb[0].mxu0
        %v760 = vadd.f32 0.0, %v759
        %v761 = vpop.f32.mrb[0].mxu0
        %762 = vdwg.mxu0
        %s763 = scalar_lea.vmem [#allocation3], 16
        %v764 = vld [vmem:[%s763] sm:$0xff]
        %v765 = vsel %vm387, %v760, -inf
        %766 = vmax.xlane.f32.xlu0 %v765
        %v767 = vpop.xlane.xlu0 %766
        %v768 = vmax.f32 %v764, %v767
        %v769 = vsub.f32 %v764, %v768
        %v770 = vmul.f32 %v769, 1.442695
        %v771 = vpow.pop %v770
        %773 = vset.pattern.permute.xlu0 0
        %774 = vperm.xlu0 %773, %v768
        %v775 = vpop.permute.xlu0 %774
        %v777 = vsub.f32 %v760, %v775
        %v778 = vmul.f32 %v777, 1.442695
        %v779 = vpow.pop %v778
        %s780 = scalar_lea.vmem [#allocation4], 16
        %v781 = vld [vmem:[%s780] sm:$0xff]
        %v782 = vmul.f32 %v771, %v781
        %v783 = vsel %vm387, %v779, 0.0
        %784 = vadd.xlane.f32.xlu0 %v783
        %v785 = vpop.xlane.xlu0 %784
        %v786 = vadd.f32 %v782, %v785
        %787 = vst.msk [vmem:[%s780] sm:$0xff] %vm409, %v786
        %s788 = scalar_lea.vmem [#allocation2], 16
        %v789 = vld [vmem:[%s788] sm:$0xff]
        %791 = vset.pattern.permute.xlu0 0
        %792 = vperm.xlu0 %791, %v771
        %v793 = vpop.permute.xlu0 %792
        %v795 = vmul.f32 %v793, %v789
        %796 = vrot.lane.b32.xlu0 %v308, 64
        %v797 = vpop.permute.xlu0 %796
        %v800 = vsel %vm387, %v779, 0
        %802 = vmatprep.subr.mxu0 0.0
        %803 = vmatpush1.msra.mxu0 %v797
        %804 = vmatprep.subr.mxu0 0.0
        %805 = vmatpush1.msra.mxu0 0.0
        %806 = vmatprep.subr.mxu0 0.0
        %807 = vmatpush1.msra.mxu0 0.0
        %808 = vmatprep.subr.mxu0 0.0
        %809 = vmatpush1.msra.mxu0 0.0
        %810 = vmatprep.subr.mxu0 0.0
        %811 = vmatpush1.msra.mxu0 0.0
        %812 = vmatprep.subr.mxu0 0.0
        %813 = vmatpush1.msra.mxu0 0.0
        %814 = vmatprep.subr.mxu0 0.0
        %815 = vmatpush1.msra.mxu0 0.0
        %816 = vmatprep.subr.mxu0 0.0
        %817 = vmatpush1.msra.mxu0 0.0
        %818 = vmatprep.subr.mxu0 0.0
        %819 = vmatpush1.msra.mxu0 0.0
        %820 = vmatprep.subr.mxu0 0.0
        %821 = vmatpush1.msra.mxu0 0.0
        %822 = vmatprep.subr.mxu0 0.0
        %823 = vmatpush1.msra.mxu0 0.0
        %824 = vmatprep.subr.mxu0 0.0
        %825 = vmatpush1.msra.mxu0 0.0
        %826 = vmatprep.subr.mxu0 0.0
        %827 = vmatpush1.msra.mxu0 0.0
        %828 = vmatprep.subr.mxu0 0.0
        %829 = vmatpush1.msra.mxu0 0.0
        %830 = vmatprep.subr.mxu0 0.0
        %831 = vmatpush1.msra.mxu0 0.0
        %832 = vmatprep.subr.mxu0 0.0
        %833 = vmatpush1.msra.mxu0 0.0
        %834 = vmatprep.subr.mxu0 0.0
        %835 = vmatpush1.msra.mxu0 0.0
        %836 = vmatprep.subr.mxu0 0.0
        %837 = vmatpush1.msra.mxu0 0.0
        %838 = vmatprep.subr.mxu0 0.0
        %839 = vmatpush1.msra.mxu0 0.0
        %840 = vmatprep.subr.mxu0 0.0
        %841 = vmatpush1.msra.mxu0 0.0
        %842 = vmatprep.subr.mxu0 0.0
        %843 = vmatpush1.msra.mxu0 0.0
        %844 = vmatprep.subr.mxu0 0.0
        %845 = vmatpush1.msra.mxu0 0.0
        %846 = vmatprep.subr.mxu0 0.0
        %847 = vmatpush1.msra.mxu0 0.0
        %848 = vmatprep.subr.mxu0 0.0
        %849 = vmatpush1.msra.mxu0 0.0
        %850 = vmatprep.subr.mxu0 0.0
        %851 = vmatpush1.msra.mxu0 0.0
        %852 = vmatprep.subr.mxu0 0.0
        %853 = vmatpush1.msra.mxu0 0.0
        %854 = vmatprep.subr.mxu0 0.0
        %855 = vmatpush1.msra.mxu0 0.0
        %856 = vmatprep.subr.mxu0 0.0
        %857 = vmatpush1.msra.mxu0 0.0
        %858 = vmatprep.subr.mxu0 0.0
        %859 = vmatpush1.msra.mxu0 0.0
        %860 = vmatprep.subr.mxu0 0.0
        %861 = vmatpush1.msra.mxu0 0.0
        %862 = vmatprep.subr.mxu0 0.0
        %863 = vmatpush1.msra.mxu0 0.0
        %864 = vmatprep.subr.mxu0 0.0
        %865 = vmatpush1.msra.mxu0 0.0
        %866 = vmatprep.mubr.f32.mxu0 0.0
        %867 = vmatmul.mubr.f32.gmra.mrb[0].mxu0 %v800
        %v868 = vpop.f32.mrb[0].mxu0
        %v869 = vadd.f32 0.0, %v868
        %v870 = vpop.f32.mrb[0].mxu0
        %871 = vdwg.mxu0
        %v872 = vadd.f32 %v795, %v869
        %873 = vst.msk [vmem:[%s788] sm:$0xff] %vm309, %v872
        %874 = vst.msk [vmem:[%s763] sm:$0xff] %vm409, %v768
        %875 = vrot.lane.b32.xlu0 %v306, 32
        %v876 = vpop.permute.xlu0 %875
        %877 = vrot.lane.b32.xlu0 %v307, 32
        %v878 = vpop.permute.xlu0 %877
        %v879 = vsel %vm309, %v876, 0
        %v881 = vsel %vm309, %v878, 0
        %883 = vmatprep.subr.mxu0 0.0
        %884 = vmatpush1.xpose.msra.mxu0 %v881
        %885 = vmatprep.subr.mxu0 0.0
        %886 = vmatpush1.xpose.msra.mxu0 0.0
        %887 = vmatprep.subr.mxu0 0.0
        %888 = vmatpush1.xpose.msra.mxu0 0.0
        %889 = vmatprep.subr.mxu0 0.0
        %890 = vmatpush1.xpose.msra.mxu0 0.0
        %891 = vmatprep.subr.mxu0 0.0
        %892 = vmatpush1.xpose.msra.mxu0 0.0
        %893 = vmatprep.subr.mxu0 0.0
        %894 = vmatpush1.xpose.msra.mxu0 0.0
        %895 = vmatprep.subr.mxu0 0.0
        %896 = vmatpush1.xpose.msra.mxu0 0.0
        %897 = vmatprep.subr.mxu0 0.0
        %898 = vmatpush1.xpose.msra.mxu0 0.0
        %899 = vmatprep.subr.mxu0 0.0
        %900 = vmatpush1.xpose.msra.mxu0 0.0
        %901 = vmatprep.subr.mxu0 0.0
        %902 = vmatpush1.xpose.msra.mxu0 0.0
        %903 = vmatprep.subr.mxu0 0.0
        %904 = vmatpush1.xpose.msra.mxu0 0.0
        %905 = vmatprep.subr.mxu0 0.0
        %906 = vmatpush1.xpose.msra.mxu0 0.0
        %907 = vmatprep.subr.mxu0 0.0
        %908 = vmatpush1.xpose.msra.mxu0 0.0
        %909 = vmatprep.subr.mxu0 0.0
        %910 = vmatpush1.xpose.msra.mxu0 0.0
        %911 = vmatprep.subr.mxu0 0.0
        %912 = vmatpush1.xpose.msra.mxu0 0.0
        %913 = vmatprep.subr.mxu0 0.0
        %914 = vmatpush1.xpose.msra.mxu0 0.0
        %915 = vmatprep.subr.mxu0 0.0
        %916 = vmatpush1.xpose.msra.mxu0 0.0
        %917 = vmatprep.subr.mxu0 0.0
        %918 = vmatpush1.xpose.msra.mxu0 0.0
        %919 = vmatprep.subr.mxu0 0.0
        %920 = vmatpush1.xpose.msra.mxu0 0.0
        %921 = vmatprep.subr.mxu0 0.0
        %922 = vmatpush1.xpose.msra.mxu0 0.0
        %923 = vmatprep.subr.mxu0 0.0
        %924 = vmatpush1.xpose.msra.mxu0 0.0
        %925 = vmatprep.subr.mxu0 0.0
        %926 = vmatpush1.xpose.msra.mxu0 0.0
        %927 = vmatprep.subr.mxu0 0.0
        %928 = vmatpush1.xpose.msra.mxu0 0.0
        %929 = vmatprep.subr.mxu0 0.0
        %930 = vmatpush1.xpose.msra.mxu0 0.0
        %931 = vmatprep.subr.mxu0 0.0
        %932 = vmatpush1.xpose.msra.mxu0 0.0
        %933 = vmatprep.subr.mxu0 0.0
        %934 = vmatpush1.xpose.msra.mxu0 0.0
        %935 = vmatprep.subr.mxu0 0.0
        %936 = vmatpush1.xpose.msra.mxu0 0.0
        %937 = vmatprep.subr.mxu0 0.0
        %938 = vmatpush1.xpose.msra.mxu0 0.0
        %939 = vmatprep.subr.mxu0 0.0
        %940 = vmatpush1.xpose.msra.mxu0 0.0
        %941 = vmatprep.subr.mxu0 0.0
        %942 = vmatpush1.xpose.msra.mxu0 0.0
        %943 = vmatprep.subr.mxu0 0.0
        %944 = vmatpush1.xpose.msra.mxu0 0.0
        %945 = vmatprep.subr.mxu0 0.0
        %946 = vmatpush1.xpose.msra.mxu0 0.0
        %947 = vmatprep.mubr.f32.mxu0 0.0
        %948 = vmatmul.mubr.f32.gmra.mrb[0].mxu0 %v879
        %v949 = vpop.f32.mrb[0].mxu0
        %v950 = vadd.f32 0.0, %v949
        %v951 = vpop.f32.mrb[0].mxu0
        %952 = vdwg.mxu0
        %s953 = scalar_lea.vmem [#allocation3], 24
        %v954 = vld [vmem:[%s953] sm:$0xff]
        %v955 = vsel %vm387, %v950, -inf
        %956 = vmax.xlane.f32.xlu0 %v955
        %v957 = vpop.xlane.xlu0 %956
        %v958 = vmax.f32 %v954, %v957
        %v959 = vsub.f32 %v954, %v958
        %v960 = vmul.f32 %v959, 1.442695
        %v961 = vpow.pop %v960
        %963 = vset.pattern.permute.xlu0 0
        %964 = vperm.xlu0 %963, %v958
        %v965 = vpop.permute.xlu0 %964
        %v967 = vsub.f32 %v950, %v965
        %v968 = vmul.f32 %v967, 1.442695
        %v969 = vpow.pop %v968
        %s970 = scalar_lea.vmem [#allocation4], 24
        %v971 = vld [vmem:[%s970] sm:$0xff]
        %v972 = vmul.f32 %v961, %v971
        %v973 = vsel %vm387, %v969, 0.0
        %974 = vadd.xlane.f32.xlu0 %v973
        %v975 = vpop.xlane.xlu0 %974
        %v976 = vadd.f32 %v972, %v975
        %977 = vst.msk [vmem:[%s970] sm:$0xff] %vm409, %v976
        %s978 = scalar_lea.vmem [#allocation2], 24
        %v979 = vld [vmem:[%s978] sm:$0xff]
        %981 = vset.pattern.permute.xlu0 0
        %982 = vperm.xlu0 %981, %v961
        %v983 = vpop.permute.xlu0 %982
        %v985 = vmul.f32 %v983, %v979
        %986 = vrot.lane.b32.xlu0 %v308, 32
        %v987 = vpop.permute.xlu0 %986
        %v990 = vsel %vm387, %v969, 0
        %992 = vmatprep.subr.mxu0 0.0
        %993 = vmatpush1.msra.mxu0 %v987
        %994 = vmatprep.subr.mxu0 0.0
        %995 = vmatpush1.msra.mxu0 0.0
        %996 = vmatprep.subr.mxu0 0.0
        %997 = vmatpush1.msra.mxu0 0.0
        %998 = vmatprep.subr.mxu0 0.0
        %999 = vmatpush1.msra.mxu0 0.0
        %1000 = vmatprep.subr.mxu0 0.0
        %1001 = vmatpush1.msra.mxu0 0.0
        %1002 = vmatprep.subr.mxu0 0.0
        %1003 = vmatpush1.msra.mxu0 0.0
        %1004 = vmatprep.subr.mxu0 0.0
        %1005 = vmatpush1.msra.mxu0 0.0
        %1006 = vmatprep.subr.mxu0 0.0
        %1007 = vmatpush1.msra.mxu0 0.0
        %1008 = vmatprep.subr.mxu0 0.0
        %1009 = vmatpush1.msra.mxu0 0.0
        %1010 = vmatprep.subr.mxu0 0.0
        %1011 = vmatpush1.msra.mxu0 0.0
        %1012 = vmatprep.subr.mxu0 0.0
        %1013 = vmatpush1.msra.mxu0 0.0
        %1014 = vmatprep.subr.mxu0 0.0
        %1015 = vmatpush1.msra.mxu0 0.0
        %1016 = vmatprep.subr.mxu0 0.0
        %1017 = vmatpush1.msra.mxu0 0.0
        %1018 = vmatprep.subr.mxu0 0.0
        %1019 = vmatpush1.msra.mxu0 0.0
        %1020 = vmatprep.subr.mxu0 0.0
        %1021 = vmatpush1.msra.mxu0 0.0
        %1022 = vmatprep.subr.mxu0 0.0
        %1023 = vmatpush1.msra.mxu0 0.0
        %1024 = vmatprep.subr.mxu0 0.0
        %1025 = vmatpush1.msra.mxu0 0.0
        %1026 = vmatprep.subr.mxu0 0.0
        %1027 = vmatpush1.msra.mxu0 0.0
        %1028 = vmatprep.subr.mxu0 0.0
        %1029 = vmatpush1.msra.mxu0 0.0
        %1030 = vmatprep.subr.mxu0 0.0
        %1031 = vmatpush1.msra.mxu0 0.0
        %1032 = vmatprep.subr.mxu0 0.0
        %1033 = vmatpush1.msra.mxu0 0.0
        %1034 = vmatprep.subr.mxu0 0.0
        %1035 = vmatpush1.msra.mxu0 0.0
        %1036 = vmatprep.subr.mxu0 0.0
        %1037 = vmatpush1.msra.mxu0 0.0
        %1038 = vmatprep.subr.mxu0 0.0
        %1039 = vmatpush1.msra.mxu0 0.0
        %1040 = vmatprep.subr.mxu0 0.0
        %1041 = vmatpush1.msra.mxu0 0.0
        %1042 = vmatprep.subr.mxu0 0.0
        %1043 = vmatpush1.msra.mxu0 0.0
        %1044 = vmatprep.subr.mxu0 0.0
        %1045 = vmatpush1.msra.mxu0 0.0
        %1046 = vmatprep.subr.mxu0 0.0
        %1047 = vmatpush1.msra.mxu0 0.0
        %1048 = vmatprep.subr.mxu0 0.0
        %1049 = vmatpush1.msra.mxu0 0.0
        %1050 = vmatprep.subr.mxu0 0.0
        %1051 = vmatpush1.msra.mxu0 0.0
        %1052 = vmatprep.subr.mxu0 0.0
        %1053 = vmatpush1.msra.mxu0 0.0
        %1054 = vmatprep.subr.mxu0 0.0
        %1055 = vmatpush1.msra.mxu0 0.0
        %1056 = vmatprep.mubr.f32.mxu0 0.0
        %1057 = vmatmul.mubr.f32.gmra.mrb[0].mxu0 %v990
        %v1058 = vpop.f32.mrb[0].mxu0
        %v1059 = vadd.f32 0.0, %v1058
        %v1060 = vpop.f32.mrb[0].mxu0
        %1061 = vdwg.mxu0
        %v1062 = vadd.f32 %v985, %v1059
        %1063 = vst.msk [vmem:[%s978] sm:$0xff] %vm309, %v1062
        %1064 = vst.msk [vmem:[%s953] sm:$0xff] %vm409, %v958
        // Predicated region
        $region49: #{tpu_custom_call.1} parent=31 // pred_check
          %p1065 = pneg %p287
        $region50: #{tpu_custom_call.1} parent=31 // pred_check_branch
          %1067 = sbr.rel (%p1065) target = $region52
        $region51: #{tpu_custom_call.1} parent=31 // pred_region
          %v1068 = vld [vmem:[#allocation4] sm:$0xff]
          %v1069 = vrcp.pop %v1068
          %v1070 = vmul.f32 %v1068, %v1069
          %v1071 = vsub.f32 2.0, %v1070
          %v1072 = vmul.f32 %v1069, %v1071
          %v1073 = vld [vmem:[#allocation2] sm:$0xff]
          %1075 = vset.pattern.permute.xlu0 0
          %1076 = vperm.xlu0 %1075, %v1072
          %v1077 = vpop.permute.xlu0 %1076
          %v1079 = vmul.f32 %v1073, %v1077
          %v1080 = vld [vmem:[%s589] sm:$0xff]
          %v1081 = vrcp.pop %v1080
          %v1082 = vmul.f32 %v1080, %v1081
          %v1083 = vsub.f32 2.0, %v1082
          %v1084 = vmul.f32 %v1081, %v1083
          %v1085 = vld [vmem:[%s597] sm:$0xff]
          %1087 = vset.pattern.permute.xlu0 0
          %1088 = vperm.xlu0 %1087, %v1084
          %v1089 = vpop.permute.xlu0 %1088
          %v1091 = vmul.f32 %v1085, %v1089
          %v1092 = vld [vmem:[%s780] sm:$0xff]
          %v1093 = vrcp.pop %v1092
          %v1094 = vmul.f32 %v1092, %v1093
          %v1095 = vsub.f32 2.0, %v1094
          %v1096 = vmul.f32 %v1093, %v1095
          %v1097 = vld [vmem:[%s788] sm:$0xff]
          %1099 = vset.pattern.permute.xlu0 0
          %1100 = vperm.xlu0 %1099, %v1096
          %v1101 = vpop.permute.xlu0 %1100
          %v1103 = vmul.f32 %v1097, %v1101
          %v1104 = vld [vmem:[%s970] sm:$0xff]
          %v1105 = vrcp.pop %v1104
          %v1106 = vmul.f32 %v1104, %v1105
          %v1107 = vsub.f32 2.0, %v1106
          %v1108 = vmul.f32 %v1105, %v1107
          %v1109 = vld [vmem:[%s978] sm:$0xff]
          %1111 = vset.pattern.permute.xlu0 0
          %1112 = vperm.xlu0 %1111, %v1108
          %v1113 = vpop.permute.xlu0 %1112
          %v1115 = vmul.f32 %v1109, %v1113
          %1117 = vrot.lane.b32.xlu0 %v1091, 32
          %v1118 = vpop.permute.xlu0 %1117
          %1121 = vrot.lane.b32.xlu0 %v1103, 64
          %v1122 = vpop.permute.xlu0 %1121
          %1125 = vrot.lane.b32.xlu0 %v1115, 96
          %v1126 = vpop.permute.xlu0 %1125
          %v1128 = vsel %vm309, %v1079, %v1118
          %vm1129 = vcmask 523264
          %v1130 = vsel %vm1129, %v1128, %v1122
          %vm1131 = vcmask 785408
          %v1132 = vsel %vm1131, %v1130, %v1126
          %1133 = vst [vmem:[%s286] sm:$0xff] %v1132
        $region52: #{tpu_custom_call.1} parent=31 // pred_fallthru
          _
        %s1134 = sand.u32 %s136, 1
        %s1135 = scalar_lea.sflag [#allocation7], %s1134
        %s1136 = sand.u32 %s136, 1
        %s1137 = smul.addr %s1136, 8
        %s1138 = scalar_lea.vmem [#allocation11], %s1137
        // Predicated region
        $region53: #{tpu_custom_call.1} parent=31 // pred_check
          %p1139 = pneg %p146
        $region54: #{tpu_custom_call.1} parent=31 // pred_check_branch
          %1141 = sbr.rel (%p1139) target = $region56
        $region55: #{tpu_custom_call.1} parent=31 // pred_region
          %s1143 = ssub.s32 128, 128
          %1144 = vsyncadd %s1135, %s1143
          %s1145 = sadd.s32 %s29, %s28
          %s1146 = smul.addr %s1145, 128
          %s1147 = scalar_lea.hbm %s3, %s1146
          %s1149 = sshll.u32 %s1138, 4
          %s1150 = int_to_ptr.vmem [resolvable:$true] %s1149
          %1152 = dma.vmem_to_hbm [thread:$0]  %s1150, 128, %s1147, %s1135
        $region56: #{tpu_custom_call.1} parent=31 // pred_fallthru
          _
      $region32: #{tpu_custom_call.1} parent=5 // pred_fallthru
        _
      %p1153 = scmp.le.s32.totalorder 2, %s18
      // Predicated region
      $region57: #{tpu_custom_call.1} parent=5 // pred_check
        %p1154 = pneg %p1153
      $region58: #{tpu_custom_call.1} parent=5 // pred_check_branch
        %1156 = sbr.rel (%p1154) target = $region60
      $region59: #{tpu_custom_call.1} parent=5 // pred_region
        %s1157 = ssub.s32 %s18, 2
        // Predicated region
        $region61: #{tpu_custom_call.1} parent=59 // pred_check
          %p1158 = pneg %p152
        $region62: #{tpu_custom_call.1} parent=59 // pred_check_branch
          %1160 = sbr.rel (%p1158) target = $region64
        $region63: #{tpu_custom_call.1} parent=59 // pred_region
          %s1161 = sand.u32 %s137, 1
          %s1162 = scalar_lea.sflag [#allocation7], %s1161
          %s1163 = sand.u32 %s137, 1
          %s1164 = smul.addr %s1163, 8
          %s1165 = scalar_lea.vmem [#allocation11], %s1164
          %1166 = dma.done %s1162, 128
        $region64: #{tpu_custom_call.1} parent=59 // pred_fallthru
          _
      $region60: #{tpu_custom_call.1} parent=5 // pred_fallthru
        _
    $region6: #{tpu_custom_call.1} parent=1 // loop_footer
      %s22 = sadd.s32 1, %s18
    $region7: #{tpu_custom_call.1} parent=1 // loop_footer_branch
      %17 = sbr.rel target = $region3
    $region8: #{tpu_custom_call.1} parent=1 // loop_exit
      _
    %1167 = vsyncpa [#allocation6], 1
    %s1168 = scalar_lea.sflag [#allocation6], 1
    %1169 = vsyncpa %s1168, 1
    %1170 = vsyncpa [#allocation9], 1
    %s1171 = scalar_lea.sflag [#allocation9], 1
    %1172 = vsyncpa %s1171, 1
    %1173 = vsyncpa [#allocation7], 1
    %s1174 = scalar_lea.sflag [#allocation7], 1
    %1175 = vsyncpa %s1174, 1

</llo_original>
